<compile_context>
chip_gen: v5e
topology: v5e:2x2
jax: 0.10.0
libtpu: 0.0.40
codegen_flags: <defaults>
</compile_context>

<pallas_src>
import functools

import jax
import jax.numpy as jnp
from jax.experimental import pallas as pl
from jax.experimental.pallas import tpu as pltpu


_SRC_PAD_SENTINEL = 1.0e6    # padded source coordinate; must exceed real data extent
_EXCLUDE_SENTINEL = 1.0e30   # d2 value written over already-picked sources


def _round_up(x, mult):
    return ((x + mult - 1) // mult) * mult


def _pad_axis(x, axis, new_size, value=0.0):
    pad = new_size - x.shape[axis]
    if pad == 0:
        return x
    widths = [(0, 0)] * x.ndim
    widths[axis] = (0, pad)
    return jnp.pad(x, widths, constant_values=value)


def _vmem_capacity_bytes():
    try:
        return int(pltpu.get_tpu_info().vmem_capacity_bytes)
    except Exception:
        return 64 * 1024 * 1024  # conservative fallback (v7x per-TC VMEM)


def _pick_tile_n(n_pad, m_pad, c1, c2, couts, param_bytes, vmem_cap):
    """Shape-aware n-tile size.

    Subtract the resident / double-buffered blocks (srcf, src coords, MLP
    params) from the physical VMEM capacity, then size Tn from the ~4 live
    (m_pad, Tn) f32 temporaries of the k-NN selection loop plus the per-column
    tile DMAs and MLP activations.  Returns (tn, required_vmem_bytes).
    """
    cout_last = couts[-1]
    fixed = (2 * c2 * m_pad + 2 * 3 * m_pad) * 4 + 2 * param_bytes
    per_col = (4 * m_pad                        # k-NN temporaries (d2, w_acc, selects)
               + 2 * (3 + c1 + cout_last)       # double-buffered tgt / tgtf / out tiles
               + 2 * (c2 + sum(couts))          # interp + MLP activations
               ) * 4
    budget = vmem_cap * 3 // 4 - fixed
    tn = (max(budget // per_col, 128) // 128) * 128
    tn = int(max(128, min(tn, 2048, n_pad)))
    required = fixed + per_col * tn
    return tn, required


def _fused_kernel(*refs, k, num_layers):
    # refs = (tgt, src, srcf, tgtf, w0a, w0b, scale0, shift0,
    #         [w_l, scale_l, shift_l for l in 1..num_layers-1], out)
    tgt_ref, src_ref, srcf_ref, tgtf_ref = refs[:4]
    w0a_ref, w0b_ref, s0_ref, b0_ref = refs[4:8]
    layer_refs = refs[8:-1]
    out_ref = refs[-1]

    t = tgt_ref[0]                         # (3, Tn)  targets on lanes (lane-dense DMA)
    s = src_ref[0]                         # (m, 3)   sources on sublanes
    m = s.shape[0]
    tn = t.shape[1]

    # Squared pairwise distances in (m, Tn) orientation, direct per-coordinate
    # difference (same formula as the reference).  Padded source rows carry a
    # huge sentinel coordinate, so no in-kernel padding mask is needed.
    d2 = jnp.zeros((m, tn), jnp.float32)
    for c in range(3):
        diff = s[:, c:c + 1] - t[c:c + 1, :]          # (m,1) - (1,Tn) -> (m,Tn)
        d2 = d2 + diff * diff

    # (m,1) iota only; compares/selects broadcast it over the lane axis.
    row = jax.lax.broadcasted_iota(jnp.int32, (m, 1), 0)

    def select_one(carry):
        d2, w_acc, w_sum = carry
        minval = jnp.min(d2, axis=0, keepdims=True)               # (1,Tn) sublane reduce
        eq = d2 <= minval
        # first index on ties (matches stable torch.sort semantics)
        min_idx = jnp.min(jnp.where(eq, row, m), axis=0, keepdims=True)
        onehot = row == min_idx                                    # (m,Tn), one hit/column
        inv_w = 1.0 / (jnp.sqrt(minval) + 1e-6)                    # (1,Tn)
        w_acc = w_acc + jnp.where(onehot, inv_w, jnp.float32(0.0))
        w_sum = w_sum + inv_w
        d2 = jnp.where(onehot, jnp.float32(_EXCLUDE_SENTINEL), d2)
        return d2, w_acc, w_sum

    carry = (d2,
             jnp.zeros((m, tn), jnp.float32),     # un-normalized inverse-distance weights
             jnp.zeros((1, tn), jnp.float32))     # normalization denominator
    if k <= 4:
        for _ in range(k):
            carry = select_one(carry)
    else:
        # bound vreg live ranges for larger k (protective; neutral at small k)
        carry = jax.lax.fori_loop(0, k, lambda _, c: select_one(c), carry, unroll=True)
    _, w_acc, w_sum = carry

    # Weighted gather == canonical MXU matmul srcf (C2,m) x w (m,Tn).
    # Normalization deferred past the matmul: scales C2*Tn elems, not m*Tn.
    srcf = srcf_ref[0]                                                 # (C2, m)
    interp = jnp.dot(srcf, w_acc, preferred_element_type=jnp.float32)  # (C2, Tn)
    interp = interp * (1.0 / w_sum)

    # Fused SharedMLP.  Layer 0 consumes the channel concat [interp ; tgt_feats]
    # via split weights (no in-kernel concat / relayout).
    y = (jnp.dot(w0a_ref[...], interp, preferred_element_type=jnp.float32)
         + jnp.dot(w0b_ref[...], tgtf_ref[0], preferred_element_type=jnp.float32))
    y = jnp.maximum(y * s0_ref[...] + b0_ref[...], 0.0)
    for l in range(num_layers - 1):
        w_ref, sc_ref, sh_ref = layer_refs[3 * l:3 * l + 3]
        y = jnp.dot(w_ref[...], y, preferred_element_type=jnp.float32)
        y = jnp.maximum(y * sc_ref[...] + sh_ref[...], 0.0)

    out_ref[0] = y                                   # (Cout_last, Tn), lane-dense store


def weighted_spatial_interpolation(tgt, src, tgt_feats, src_feats, params, k=3):
    """tgt: (B, n, 3), src: (B, m, 3), tgt_feats: (B, C1, n), src_feats: (B, C2, m).

    params: list of (conv_weight (Cout, Cin), bn_scale (Cout,1), bn_shift (Cout,1))
            per MLPBlock (eval-mode BatchNorm folded into scale/shift).
    Returns (B, Cout_last, n) float32.
    """
    B, n, _ = tgt.shape
    _, m, _ = src.shape
    C1 = tgt_feats.shape[1]
    C2 = src_feats.shape[1]
    num_layers = len(params)
    assert num_layers >= 1
    assert k <= m, "k must not exceed the number of source points"

    couts = [p[0].shape[0] for p in params]
    cout_last = couts[-1]
    param_bytes = sum(int(w.size + sc.size + sh.size) for (w, sc, sh) in params) * 4

    # Lane-dense padding of the point dimensions; shape-aware tile size.
    n_pad = _round_up(n, 128)
    m_pad = _round_up(m, 128)
    vmem_cap = _vmem_capacity_bytes()
    tn, required = _pick_tile_n(n_pad, m_pad, C1, C2, couts, param_bytes, vmem_cap)
    n_pad = _round_up(n_pad, tn)                       # make the n-tile grid exact

    vmem_limit = max(32 * 1024 * 1024, required + 8 * 1024 * 1024)
    vmem_limit = min(vmem_limit, vmem_cap * 7 // 8)    # <=56 MiB on v7x, <=112 MiB on v5e/v6e
    vmem_limit = max(vmem_limit, required)

    # Lane-dense target layouts; padded source rows get a huge coordinate so
    # they can never be among the k nearest (replaces the in-kernel mask).
    tgt_cn = jnp.transpose(_pad_axis(tgt, 1, n_pad), (0, 2, 1))        # (B, 3, n_pad)
    tgtf_p = _pad_axis(tgt_feats, 2, n_pad)                            # (B, C1, n_pad)
    src_p = _pad_axis(src, 1, m_pad, value=_SRC_PAD_SENTINEL)          # (B, m_pad, 3)
    srcf_p = _pad_axis(src_feats, 2, m_pad)                            # (B, C2, m_pad)

    # Split the first layer's weight over [interp | tgt_feats] channels.
    w0, s0, b0 = params[0]
    w0a, w0b = w0[:, :C2], w0[:, C2:]

    inputs = [tgt_cn, src_p, srcf_p, tgtf_p, w0a, w0b, s0, b0]
    in_specs = [
        pl.BlockSpec((1, 3, tn), lambda b, t: (b, 0, t)),
        pl.BlockSpec((1, m_pad, 3), lambda b, t: (b, 0, 0)),     # resident across n-tiles
        pl.BlockSpec((1, C2, m_pad), lambda b, t: (b, 0, 0)),    # resident across n-tiles
        pl.BlockSpec((1, C1, tn), lambda b, t: (b, 0, t)),
        pl.BlockSpec(w0a.shape, lambda b, t: (0, 0)),
        pl.BlockSpec(w0b.shape, lambda b, t: (0, 0)),
        pl.BlockSpec(s0.shape, lambda b, t: (0, 0)),
        pl.BlockSpec(b0.shape, lambda b, t: (0, 0)),
    ]
    for (w_l, sc_l, sh_l) in params[1:]:
        inputs += [w_l, sc_l, sh_l]
        in_specs += [
            pl.BlockSpec(w_l.shape, lambda b, t: (0, 0)),
            pl.BlockSpec(sc_l.shape, lambda b, t: (0, 0)),
            pl.BlockSpec(sh_l.shape, lambda b, t: (0, 0)),
        ]

    out = pl.pallas_call(
        functools.partial(_fused_kernel, k=k, num_layers=num_layers),
        out_shape=jax.ShapeDtypeStruct((B, cout_last, n_pad), jnp.float32),
        grid=(B, n_pad // tn),
        in_specs=in_specs,
        out_specs=pl.BlockSpec((1, cout_last, tn), lambda b, t: (b, 0, t)),
        compiler_params=pltpu.CompilerParams(
            # batch and n-tile iterations are independent -> shard across dual TCs (v7x)
            dimension_semantics=("parallel", "parallel"),
            vmem_limit_bytes=int(vmem_limit),
        ),
    )(*inputs)

    return out[:, :, :n]


def _reference(tgt, src, tgt_feats, src_feats, params, k=3):
    """Pure-JAX replica of the PyTorch forward (eval-mode BN)."""

    def one(tgt_b, src_b, srcf_b):
        d = jnp.sqrt(jnp.sum((tgt_b[:, None, :] - src_b[None, :, :]) ** 2, axis=-1))
        neg, idx = jax.lax.top_k(-d, k)                       # k smallest distances
        dk = -neg
        w = 1.0 / (dk + 1e-6)
        w = w / jnp.sum(w, axis=-1, keepdims=True)            # (n, k)
        feats = srcf_b[:, idx]                                # (C2, n, k)
        return jnp.sum(feats * w[None, :, :], axis=-1)        # (C2, n)

    interp = jax.vmap(one)(tgt, src, src_feats)
    x = jnp.concatenate([interp, tgt_feats], axis=1)
    for (w, scale, shift) in params:
        x = jnp.einsum("oc,bcn->bon", w, x)
        x = x * scale[None] + shift[None]
        x = jnp.maximum(x, 0.0)
    return x


if __name__ == "__main__":
    key = jax.random.PRNGKey(0)
    B, n, m, C1, C2, k = 2, 16, 16, 4, 8, 3
    mlps = [C1 + C2, 32, 16]

    ks = jax.random.split(key, 5)
    tgt = jax.random.normal(ks[0], (B, n, 3), jnp.float32)       # (B, n, 3)
    src = jax.random.normal(ks[1], (B, m, 3), jnp.float32)       # (B, m, 3)
    tgt_feats = jax.random.normal(ks[2], (B, C1, n), jnp.float32)
    src_feats = jax.random.normal(ks[3], (B, C2, m), jnp.float32)

    # deterministic SharedMLP parameters (Conv1d weight + folded BatchNorm scale/shift)
    params = []
    pkey = ks[4]
    for i in range(len(mlps) - 1):
        cin, cout = mlps[i], mlps[i + 1]
        pkey, kw, kg, kb, km, kv = jax.random.split(pkey, 6)
        w = jax.random.normal(kw, (cout, cin), jnp.float32) * (1.0 / jnp.sqrt(cin))
        gamma = 1.0 + 0.1 * jax.random.normal(kg, (cout,), jnp.float32)
        beta = 0.1 * jax.random.normal(kb, (cout,), jnp.float32)
        rmean = 0.05 * jax.random.normal(km, (cout,), jnp.float32)
        rvar = 1.0 + 0.1 * jax.random.uniform(kv, (cout,), jnp.float32)
        scale = gamma / jnp.sqrt(rvar + 1e-5)
        shift = beta - rmean * scale
        params.append((w, scale.reshape(cout, 1), shift.reshape(cout, 1)))

    out = weighted_spatial_interpolation(tgt, src, tgt_feats, src_feats, params, k=k)
    out = jax.block_until_ready(out)

    ref = _reference(tgt, src, tgt_feats, src_feats, params, k=k)
    assert out.shape == (B, mlps[-1], n), out.shape
    assert jnp.allclose(out, ref, rtol=1e-4, atol=1e-4), float(jnp.max(jnp.abs(out - ref)))
    print("KERNEL_OK")
</pallas_src>

<mosaic_0001>
module attributes {stable_mosaic.version = 11 : i64} {
  func.func @_fused_kernel(%arg0: i32, %arg1: i32, %arg2: memref<1x3x128xf32, #tpu.memory_space<vmem>>, %arg3: memref<1x128x3xf32, #tpu.memory_space<vmem>>, %arg4: memref<1x8x128xf32, #tpu.memory_space<vmem>>, %arg5: memref<1x4x128xf32, #tpu.memory_space<vmem>>, %arg6: memref<32x8xf32, #tpu.memory_space<vmem>>, %arg7: memref<32x4xf32, #tpu.memory_space<vmem>>, %arg8: memref<32x1xf32, #tpu.memory_space<vmem>>, %arg9: memref<32x1xf32, #tpu.memory_space<vmem>>, %arg10: memref<16x32xf32, #tpu.memory_space<vmem>>, %arg11: memref<16x1xf32, #tpu.memory_space<vmem>>, %arg12: memref<16x1xf32, #tpu.memory_space<vmem>>, %arg13: memref<1x16x128xf32, #tpu.memory_space<vmem>>) attributes {dimension_semantics = [#tpu.dimension_semantics<parallel>, #tpu.dimension_semantics<parallel>], iteration_bounds = array<i64: 2, 1>, scalar_prefetch = 0 : i64, scratch_operands = 0 : i64, tpu.core_type = #tpu.core_type<tc>, window_params = [{transform_indices = @transform_0, window_bounds = array<i64: 1, 3, 128>}, {transform_indices = @transform_1, window_bounds = array<i64: 1, 128, 3>}, {transform_indices = @transform_2, window_bounds = array<i64: 1, 8, 128>}, {transform_indices = @transform_3, window_bounds = array<i64: 1, 4, 128>}, {pipeline_mode = #tpu.pipeline_mode<synchronous>, transform_indices = @transform_4, window_bounds = array<i64: 32, 8>}, {pipeline_mode = #tpu.pipeline_mode<synchronous>, transform_indices = @transform_5, window_bounds = array<i64: 32, 4>}, {pipeline_mode = #tpu.pipeline_mode<synchronous>, transform_indices = @transform_6, window_bounds = array<i64: 32, 1>}, {pipeline_mode = #tpu.pipeline_mode<synchronous>, transform_indices = @transform_7, window_bounds = array<i64: 32, 1>}, {pipeline_mode = #tpu.pipeline_mode<synchronous>, transform_indices = @transform_8, window_bounds = array<i64: 16, 32>}, {pipeline_mode = #tpu.pipeline_mode<synchronous>, transform_indices = @transform_9, window_bounds = array<i64: 16, 1>}, {pipeline_mode = #tpu.pipeline_mode<synchronous>, transform_indices = @transform_10, window_bounds = array<i64: 16, 1>}, {transform_indices = @transform_11, window_bounds = array<i64: 1, 16, 128>}]} {
    %c0 = arith.constant 0 : index
    %c0_0 = arith.constant 0 : index
    %c0_1 = arith.constant 0 : index
    %0 = vector.load %arg2[%c0, %c0_0, %c0_1] : memref<1x3x128xf32, #tpu.memory_space<vmem>>, vector<1x3x128xf32>
    %1 = vector.shape_cast %0 : vector<1x3x128xf32> to vector<3x128xf32>
    %c0_2 = arith.constant 0 : index
    %c0_3 = arith.constant 0 : index
    %c0_4 = arith.constant 0 : index
    %2 = vector.load %arg3[%c0_2, %c0_3, %c0_4] : memref<1x128x3xf32, #tpu.memory_space<vmem>>, vector<1x128x3xf32>
    %3 = vector.shape_cast %2 : vector<1x128x3xf32> to vector<128x3xf32>
    %cst = arith.constant 0.000000e+00 : f32
    %4 = vector.broadcast %cst : f32 to vector<128x128xf32>
    %5 = vector.extract_strided_slice %3 {offsets = [0, 0], sizes = [128, 1], strides = [1, 1]} : vector<128x3xf32> to vector<128x1xf32>
    %6 = vector.extract_strided_slice %1 {offsets = [0, 0], sizes = [1, 128], strides = [1, 1]} : vector<3x128xf32> to vector<1x128xf32>
    %7 = vector.broadcast %5 : vector<128x1xf32> to vector<128x128xf32>
    %8 = vector.broadcast %6 : vector<1x128xf32> to vector<128x128xf32>
    %9 = arith.subf %7, %8 : vector<128x128xf32>
    %10 = arith.mulf %9, %9 : vector<128x128xf32>
    %11 = arith.addf %4, %10 : vector<128x128xf32>
    %12 = vector.extract_strided_slice %3 {offsets = [0, 1], sizes = [128, 1], strides = [1, 1]} : vector<128x3xf32> to vector<128x1xf32>
    %13 = vector.extract_strided_slice %1 {offsets = [1, 0], sizes = [1, 128], strides = [1, 1]} : vector<3x128xf32> to vector<1x128xf32>
    %14 = vector.broadcast %12 : vector<128x1xf32> to vector<128x128xf32>
    %15 = vector.broadcast %13 : vector<1x128xf32> to vector<128x128xf32>
    %16 = arith.subf %14, %15 : vector<128x128xf32>
    %17 = arith.mulf %16, %16 : vector<128x128xf32>
    %18 = arith.addf %11, %17 : vector<128x128xf32>
    %19 = vector.extract_strided_slice %3 {offsets = [0, 2], sizes = [128, 1], strides = [1, 1]} : vector<128x3xf32> to vector<128x1xf32>
    %20 = vector.extract_strided_slice %1 {offsets = [2, 0], sizes = [1, 128], strides = [1, 1]} : vector<3x128xf32> to vector<1x128xf32>
    %21 = vector.broadcast %19 : vector<128x1xf32> to vector<128x128xf32>
    %22 = vector.broadcast %20 : vector<1x128xf32> to vector<128x128xf32>
    %23 = arith.subf %21, %22 : vector<128x128xf32>
    %24 = arith.mulf %23, %23 : vector<128x128xf32>
    %25 = arith.addf %18, %24 : vector<128x128xf32>
    %26 = tpu.iota {dimensions = array<i32: 0>} : vector<128x1xi32>
    %cst_5 = arith.constant 0.000000e+00 : f32
    %27 = vector.broadcast %cst_5 : f32 to vector<128x128xf32>
    %cst_6 = arith.constant 0.000000e+00 : f32
    %28 = vector.broadcast %cst_6 : f32 to vector<1x128xf32>
    %cst_7 = arith.constant dense<0x7F800000> : vector<128xf32>
    %29 = vector.multi_reduction <minimumf>, %25, %cst_7 [0] : vector<128x128xf32> to vector<128xf32>
    %30 = vector.shape_cast %29 : vector<128xf32> to vector<1x128xf32>
    %31 = vector.broadcast %30 : vector<1x128xf32> to vector<128x128xf32>
    %32 = arith.cmpf ole, %25, %31 : vector<128x128xf32>
    %c128_i32 = arith.constant 128 : i32
    %33 = vector.shape_cast %26 : vector<128x1xi32> to vector<128x1xi32>
    %34 = vector.broadcast %33 : vector<128x1xi32> to vector<128x128xi32>
    %35 = vector.broadcast %c128_i32 : i32 to vector<128x128xi32>
    %36 = arith.select %32, %34, %35 : vector<128x128xi1>, vector<128x128xi32>
    %cst_8 = arith.constant dense<2147483647> : vector<128xi32>
    %37 = vector.multi_reduction <minsi>, %36, %cst_8 [0] : vector<128x128xi32> to vector<128xi32>
    %38 = vector.shape_cast %37 : vector<128xi32> to vector<1x128xi32>
    %39 = vector.broadcast %26 : vector<128x1xi32> to vector<128x128xi32>
    %40 = vector.broadcast %38 : vector<1x128xi32> to vector<128x128xi32>
    %41 = arith.cmpi eq, %39, %40 : vector<128x128xi32>
    %42 = math.sqrt %30 : vector<1x128xf32>
    %cst_9 = arith.constant 9.99999997E-7 : f32
    %43 = vector.broadcast %cst_9 : f32 to vector<1x128xf32>
    %44 = arith.addf %42, %43 : vector<1x128xf32>
    %cst_10 = arith.constant 1.000000e+00 : f32
    %45 = vector.broadcast %cst_10 : f32 to vector<1x128xf32>
    %46 = arith.divf %45, %44 : vector<1x128xf32>
    %cst_11 = arith.constant 0.000000e+00 : f32
    %47 = vector.shape_cast %46 : vector<1x128xf32> to vector<1x128xf32>
    %48 = vector.broadcast %47 : vector<1x128xf32> to vector<128x128xf32>
    %49 = vector.broadcast %cst_11 : f32 to vector<128x128xf32>
    %50 = arith.select %41, %48, %49 : vector<128x128xi1>, vector<128x128xf32>
    %51 = arith.addf %27, %50 : vector<128x128xf32>
    %52 = arith.addf %28, %46 : vector<1x128xf32>
    %cst_12 = arith.constant 1.000000e+30 : f32
    %53 = vector.broadcast %cst_12 : f32 to vector<128x128xf32>
    %54 = arith.select %41, %53, %25 : vector<128x128xi1>, vector<128x128xf32>
    %cst_13 = arith.constant dense<0x7F800000> : vector<128xf32>
    %55 = vector.multi_reduction <minimumf>, %54, %cst_13 [0] : vector<128x128xf32> to vector<128xf32>
    %56 = vector.shape_cast %55 : vector<128xf32> to vector<1x128xf32>
    %57 = vector.broadcast %56 : vector<1x128xf32> to vector<128x128xf32>
    %58 = arith.cmpf ole, %54, %57 : vector<128x128xf32>
    %c128_i32_14 = arith.constant 128 : i32
    %59 = vector.shape_cast %26 : vector<128x1xi32> to vector<128x1xi32>
    %60 = vector.broadcast %59 : vector<128x1xi32> to vector<128x128xi32>
    %61 = vector.broadcast %c128_i32_14 : i32 to vector<128x128xi32>
    %62 = arith.select %58, %60, %61 : vector<128x128xi1>, vector<128x128xi32>
    %cst_15 = arith.constant dense<2147483647> : vector<128xi32>
    %63 = vector.multi_reduction <minsi>, %62, %cst_15 [0] : vector<128x128xi32> to vector<128xi32>
    %64 = vector.shape_cast %63 : vector<128xi32> to vector<1x128xi32>
    %65 = vector.broadcast %26 : vector<128x1xi32> to vector<128x128xi32>
    %66 = vector.broadcast %64 : vector<1x128xi32> to vector<128x128xi32>
    %67 = arith.cmpi eq, %65, %66 : vector<128x128xi32>
    %68 = math.sqrt %56 : vector<1x128xf32>
    %cst_16 = arith.constant 9.99999997E-7 : f32
    %69 = vector.broadcast %cst_16 : f32 to vector<1x128xf32>
    %70 = arith.addf %68, %69 : vector<1x128xf32>
    %cst_17 = arith.constant 1.000000e+00 : f32
    %71 = vector.broadcast %cst_17 : f32 to vector<1x128xf32>
    %72 = arith.divf %71, %70 : vector<1x128xf32>
    %cst_18 = arith.constant 0.000000e+00 : f32
    %73 = vector.shape_cast %72 : vector<1x128xf32> to vector<1x128xf32>
    %74 = vector.broadcast %73 : vector<1x128xf32> to vector<128x128xf32>
    %75 = vector.broadcast %cst_18 : f32 to vector<128x128xf32>
    %76 = arith.select %67, %74, %75 : vector<128x128xi1>, vector<128x128xf32>
    %77 = arith.addf %51, %76 : vector<128x128xf32>
    %78 = arith.addf %52, %72 : vector<1x128xf32>
    %cst_19 = arith.constant 1.000000e+30 : f32
    %79 = vector.broadcast %cst_19 : f32 to vector<128x128xf32>
    %80 = arith.select %67, %79, %54 : vector<128x128xi1>, vector<128x128xf32>
    %cst_20 = arith.constant dense<0x7F800000> : vector<128xf32>
    %81 = vector.multi_reduction <minimumf>, %80, %cst_20 [0] : vector<128x128xf32> to vector<128xf32>
    %82 = vector.shape_cast %81 : vector<128xf32> to vector<1x128xf32>
    %83 = vector.broadcast %82 : vector<1x128xf32> to vector<128x128xf32>
    %84 = arith.cmpf ole, %80, %83 : vector<128x128xf32>
    %c128_i32_21 = arith.constant 128 : i32
    %85 = vector.shape_cast %26 : vector<128x1xi32> to vector<128x1xi32>
    %86 = vector.broadcast %85 : vector<128x1xi32> to vector<128x128xi32>
    %87 = vector.broadcast %c128_i32_21 : i32 to vector<128x128xi32>
    %88 = arith.select %84, %86, %87 : vector<128x128xi1>, vector<128x128xi32>
    %cst_22 = arith.constant dense<2147483647> : vector<128xi32>
    %89 = vector.multi_reduction <minsi>, %88, %cst_22 [0] : vector<128x128xi32> to vector<128xi32>
    %90 = vector.shape_cast %89 : vector<128xi32> to vector<1x128xi32>
    %91 = vector.broadcast %26 : vector<128x1xi32> to vector<128x128xi32>
    %92 = vector.broadcast %90 : vector<1x128xi32> to vector<128x128xi32>
    %93 = arith.cmpi eq, %91, %92 : vector<128x128xi32>
    %94 = math.sqrt %82 : vector<1x128xf32>
    %cst_23 = arith.constant 9.99999997E-7 : f32
    %95 = vector.broadcast %cst_23 : f32 to vector<1x128xf32>
    %96 = arith.addf %94, %95 : vector<1x128xf32>
    %cst_24 = arith.constant 1.000000e+00 : f32
    %97 = vector.broadcast %cst_24 : f32 to vector<1x128xf32>
    %98 = arith.divf %97, %96 : vector<1x128xf32>
    %cst_25 = arith.constant 0.000000e+00 : f32
    %99 = vector.shape_cast %98 : vector<1x128xf32> to vector<1x128xf32>
    %100 = vector.broadcast %99 : vector<1x128xf32> to vector<128x128xf32>
    %101 = vector.broadcast %cst_25 : f32 to vector<128x128xf32>
    %102 = arith.select %93, %100, %101 : vector<128x128xi1>, vector<128x128xf32>
    %103 = arith.addf %77, %102 : vector<128x128xf32>
    %104 = arith.addf %78, %98 : vector<1x128xf32>
    %c0_26 = arith.constant 0 : index
    %c0_27 = arith.constant 0 : index
    %c0_28 = arith.constant 0 : index
    %105 = vector.load %arg4[%c0_26, %c0_27, %c0_28] : memref<1x8x128xf32, #tpu.memory_space<vmem>>, vector<1x8x128xf32>
    %106 = vector.shape_cast %105 : vector<1x8x128xf32> to vector<8x128xf32>
    %cst_29 = arith.constant dense<0.000000e+00> : vector<8x128xf32>
    %107 = tpu.matmul %106, %103, %cst_29 {dimension_numbers = #tpu.dot_dimension_numbers<[1], [0], [0], [1], [0, 0, 1, 1], [], []>} : vector<8x128xf32>, vector<128x128xf32>, vector<8x128xf32> -> vector<8x128xf32>
    %cst_30 = arith.constant 1.000000e+00 : f32
    %108 = vector.broadcast %cst_30 : f32 to vector<1x128xf32>
    %109 = arith.divf %108, %104 : vector<1x128xf32>
    %110 = vector.broadcast %109 : vector<1x128xf32> to vector<8x128xf32>
    %111 = arith.mulf %107, %110 : vector<8x128xf32>
    %c0_31 = arith.constant 0 : index
    %c0_32 = arith.constant 0 : index
    %112 = vector.load %arg6[%c0_31, %c0_32] : memref<32x8xf32, #tpu.memory_space<vmem>>, vector<32x8xf32>
    %cst_33 = arith.constant dense<0.000000e+00> : vector<32x128xf32>
    %113 = tpu.matmul %112, %111, %cst_33 {dimension_numbers = #tpu.dot_dimension_numbers<[1], [0], [0], [1], [0, 0, 1, 1], [], []>} : vector<32x8xf32>, vector<8x128xf32>, vector<32x128xf32> -> vector<32x128xf32>
    %c0_34 = arith.constant 0 : index
    %c0_35 = arith.constant 0 : index
    %114 = vector.load %arg7[%c0_34, %c0_35] : memref<32x4xf32, #tpu.memory_space<vmem>>, vector<32x4xf32>
    %c0_36 = arith.constant 0 : index
    %c0_37 = arith.constant 0 : index
    %c0_38 = arith.constant 0 : index
    %115 = vector.load %arg5[%c0_36, %c0_37, %c0_38] : memref<1x4x128xf32, #tpu.memory_space<vmem>>, vector<1x4x128xf32>
    %116 = vector.shape_cast %115 : vector<1x4x128xf32> to vector<4x128xf32>
    %cst_39 = arith.constant dense<0.000000e+00> : vector<32x128xf32>
    %117 = tpu.matmul %114, %116, %cst_39 {dimension_numbers = #tpu.dot_dimension_numbers<[1], [0], [0], [1], [0, 0, 1, 1], [], []>} : vector<32x4xf32>, vector<4x128xf32>, vector<32x128xf32> -> vector<32x128xf32>
    %118 = arith.addf %113, %117 : vector<32x128xf32>
    %c0_40 = arith.constant 0 : index
    %c0_41 = arith.constant 0 : index
    %119 = vector.load %arg8[%c0_40, %c0_41] : memref<32x1xf32, #tpu.memory_space<vmem>>, vector<32x1xf32>
    %120 = vector.broadcast %119 : vector<32x1xf32> to vector<32x128xf32>
    %121 = arith.mulf %118, %120 : vector<32x128xf32>
    %c0_42 = arith.constant 0 : index
    %c0_43 = arith.constant 0 : index
    %122 = vector.load %arg9[%c0_42, %c0_43] : memref<32x1xf32, #tpu.memory_space<vmem>>, vector<32x1xf32>
    %123 = vector.broadcast %122 : vector<32x1xf32> to vector<32x128xf32>
    %124 = arith.addf %121, %123 : vector<32x128xf32>
    %cst_44 = arith.constant 0.000000e+00 : f32
    %125 = vector.broadcast %cst_44 : f32 to vector<32x128xf32>
    %126 = arith.maximumf %124, %125 : vector<32x128xf32>
    %c0_45 = arith.constant 0 : index
    %c0_46 = arith.constant 0 : index
    %127 = vector.load %arg10[%c0_45, %c0_46] : memref<16x32xf32, #tpu.memory_space<vmem>>, vector<16x32xf32>
    %cst_47 = arith.constant dense<0.000000e+00> : vector<16x128xf32>
    %128 = tpu.matmul %127, %126, %cst_47 {dimension_numbers = #tpu.dot_dimension_numbers<[1], [0], [0], [1], [0, 0, 1, 1], [], []>} : vector<16x32xf32>, vector<32x128xf32>, vector<16x128xf32> -> vector<16x128xf32>
    %c0_48 = arith.constant 0 : index
    %c0_49 = arith.constant 0 : index
    %129 = vector.load %arg11[%c0_48, %c0_49] : memref<16x1xf32, #tpu.memory_space<vmem>>, vector<16x1xf32>
    %130 = vector.broadcast %129 : vector<16x1xf32> to vector<16x128xf32>
    %131 = arith.mulf %128, %130 : vector<16x128xf32>
    %c0_50 = arith.constant 0 : index
    %c0_51 = arith.constant 0 : index
    %132 = vector.load %arg12[%c0_50, %c0_51] : memref<16x1xf32, #tpu.memory_space<vmem>>, vector<16x1xf32>
    %133 = vector.broadcast %132 : vector<16x1xf32> to vector<16x128xf32>
    %134 = arith.addf %131, %133 : vector<16x128xf32>
    %cst_52 = arith.constant 0.000000e+00 : f32
    %135 = vector.broadcast %cst_52 : f32 to vector<16x128xf32>
    %136 = arith.maximumf %134, %135 : vector<16x128xf32>
    %c0_53 = arith.constant 0 : index
    %c0_54 = arith.constant 0 : index
    %c0_55 = arith.constant 0 : index
    %137 = vector.load %arg13[%c0_53, %c0_54, %c0_55] : memref<1x16x128xf32, #tpu.memory_space<vmem>>, vector<1x16x128xf32>
    %138 = vector.shape_cast %137 : vector<1x16x128xf32> to vector<16x128xf32>
    %139 = vector.shape_cast %136 : vector<16x128xf32> to vector<1x16x128xf32>
    tpu.vector_store %arg13[%c0_53, %c0_54, %c0_55], %139 {strides = array<i32>} : memref<1x16x128xf32, #tpu.memory_space<vmem>>, vector<1x16x128xf32>,
    return
  }
  func.func @transform_0(%arg0: i32, %arg1: i32) -> (i32, i32, i32) {
    %c0_i32 = arith.constant 0 : i32
    %c0_i32_0 = arith.constant 0 : i32
    return %arg0, %c0_i32, %arg1 : i32, i32, i32
  }
  func.func @transform_1(%arg0: i32, %arg1: i32) -> (i32, i32, i32) {
    %c0_i32 = arith.constant 0 : i32
    %c0_i32_0 = arith.constant 0 : i32
    %c0_i32_1 = arith.constant 0 : i32
    return %arg0, %c0_i32, %c0_i32_0 : i32, i32, i32
  }
  func.func @transform_2(%arg0: i32, %arg1: i32) -> (i32, i32, i32) {
    %c0_i32 = arith.constant 0 : i32
    %c0_i32_0 = arith.constant 0 : i32
    %c0_i32_1 = arith.constant 0 : i32
    return %arg0, %c0_i32, %c0_i32_0 : i32, i32, i32
  }
  func.func @transform_3(%arg0: i32, %arg1: i32) -> (i32, i32, i32) {
    %c0_i32 = arith.constant 0 : i32
    %c0_i32_0 = arith.constant 0 : i32
    return %arg0, %c0_i32, %arg1 : i32, i32, i32
  }
  func.func @transform_4(%arg0: i32, %arg1: i32) -> (i32, i32) {
    %c0_i32 = arith.constant 0 : i32
    %c0_i32_0 = arith.constant 0 : i32
    %c0_i32_1 = arith.constant 0 : i32
    return %c0_i32, %c0_i32_0 : i32, i32
  }
  func.func @transform_5(%arg0: i32, %arg1: i32) -> (i32, i32) {
    %c0_i32 = arith.constant 0 : i32
    %c0_i32_0 = arith.constant 0 : i32
    %c0_i32_1 = arith.constant 0 : i32
    return %c0_i32, %c0_i32_0 : i32, i32
  }
  func.func @transform_6(%arg0: i32, %arg1: i32) -> (i32, i32) {
    %c0_i32 = arith.constant 0 : i32
    %c0_i32_0 = arith.constant 0 : i32
    %c0_i32_1 = arith.constant 0 : i32
    return %c0_i32, %c0_i32_0 : i32, i32
  }
  func.func @transform_7(%arg0: i32, %arg1: i32) -> (i32, i32) {
    %c0_i32 = arith.constant 0 : i32
    %c0_i32_0 = arith.constant 0 : i32
    %c0_i32_1 = arith.constant 0 : i32
    return %c0_i32, %c0_i32_0 : i32, i32
  }
  func.func @transform_8(%arg0: i32, %arg1: i32) -> (i32, i32) {
    %c0_i32 = arith.constant 0 : i32
    %c0_i32_0 = arith.constant 0 : i32
    %c0_i32_1 = arith.constant 0 : i32
    return %c0_i32, %c0_i32_0 : i32, i32
  }
  func.func @transform_9(%arg0: i32, %arg1: i32) -> (i32, i32) {
    %c0_i32 = arith.constant 0 : i32
    %c0_i32_0 = arith.constant 0 : i32
    %c0_i32_1 = arith.constant 0 : i32
    return %c0_i32, %c0_i32_0 : i32, i32
  }
  func.func @transform_10(%arg0: i32, %arg1: i32) -> (i32, i32) {
    %c0_i32 = arith.constant 0 : i32
    %c0_i32_0 = arith.constant 0 : i32
    %c0_i32_1 = arith.constant 0 : i32
    return %c0_i32, %c0_i32_0 : i32, i32
  }
  func.func @transform_11(%arg0: i32, %arg1: i32) -> (i32, i32, i32) {
    %c0_i32 = arith.constant 0 : i32
    %c0_i32_0 = arith.constant 0 : i32
    return %arg0, %c0_i32, %arg1 : i32, i32, i32
  }
}

</mosaic_0001>

<llo_original>
// kernel: tpu_custom_call.1
$region0: #{tpu_custom_call.1}
  #allocation0 [shape = 'u32[]', space=smem, size = 0x4, offset = 0x4, fixed_abs, tag = 'smem constant byte address 0x4 - core index']
  #allocation1 [shape = 'u32[72,128]{1,0:T(1,128)}', space=vmem, size = 0x9000, scoped, tag = 'internal scratch']
  %s0 = inlined_call_operand.vmem [shape: f32[2,3,128], index: 0, kind: input, shape index: {}]
  %s1 = inlined_call_operand.vmem [shape: f32[2,128,3], index: 1, kind: input, shape index: {}]
  %s2 = inlined_call_operand.vmem [shape: f32[2,8,128], index: 2, kind: input, shape index: {}]
  %s3 = inlined_call_operand.vmem [shape: f32[2,4,128], index: 3, kind: input, shape index: {}]
  %s4 = inlined_call_operand.vmem [shape: f32[32,8], index: 4, kind: input, shape index: {}]
  %s5 = inlined_call_operand.vmem [shape: f32[32,4], index: 5, kind: input, shape index: {}]
  %s6 = inlined_call_operand.vmem [shape: f32[32,1], index: 6, kind: input, shape index: {}]
  %s7 = inlined_call_operand.vmem [shape: f32[32,1], index: 7, kind: input, shape index: {}]
  %s8 = inlined_call_operand.vmem [shape: f32[16,32], index: 8, kind: input, shape index: {}]
  %s9 = inlined_call_operand.vmem [shape: f32[16,1], index: 9, kind: input, shape index: {}]
  %s10 = inlined_call_operand.vmem [shape: f32[16,1], index: 10, kind: input, shape index: {}]
  %s11 = inlined_call_operand.hbm [shape: f32[2,16,128], index: 11, kind: output, shape index: {}]
  %s12 = sld [smem:[#allocation0]]
  $region77: #{tpu_custom_call.1} parent=0
    _
  %s14 = ssub.s32 1, %s12
  %s15 = scalar_select 0, %s14, %s12
  $region1: #{tpu_custom_call.1} parent=0
    #allocation2 [shape = 'u8[16384]{0}', space=vmem, size = 0x4000, scoped, tag = 'output window, operand 0']
    #allocation3 [shape = 's32[2]{0}', space=sflag, size = 0x8, scoped, tag = 'scoped memory for tpu_custom_call.1']
    %16 = vsyncpa [#allocation3], 0
    %s17 = scalar_lea.sflag [#allocation3], 1
    %18 = vsyncpa %s17, 0
    loop: start=0, step=1, limit=4
    $region2: #{tpu_custom_call.1} parent=1 // loop_pre_header
      _
    $region3: #{tpu_custom_call.1} parent=1 // loop_header
      %s20 = sphi 0, %s24
      %p21 = scmp.ge.s32.totalorder %s20, 4
      %s27 = sphi 0, %s39
      %s28 = sphi 0, %s35
      %s29 = sphi 0, %s27
      %s30 = sphi 0, %s28
      %s31 = sphi 0, %s29
      %s32 = sphi 0, %s30
      %s44 = sphi 0, %s46
      %s47 = sphi 0, %s44
      %s48 = sphi 0, %s47
      %s64 = sphi 0, %s48
      %s70 = sphi 0, %s72
      %s73 = sphi 0, %s70
      %s74 = sphi 0, %s73
      %s90 = sphi 0, %s74
      %s96 = sphi 0, %s98
      %s99 = sphi 0, %s96
      %s100 = sphi 0, %s99
      %s116 = sphi 0, %s100
      %s124 = sphi 0, %s126
      %s127 = sphi 0, %s124
      %s128 = sphi 0, %s127
      %s144 = sphi 0, %s128
      %s148 = sphi 0, %s148
      %s150 = sphi 0, %s148
      %s151 = sphi 0, %s150
      %s165 = sphi 0, %s151
      %s169 = sphi 0, %s169
      %s171 = sphi 0, %s169
      %s172 = sphi 0, %s171
      %s186 = sphi 0, %s172
      %s190 = sphi 0, %s190
      %s192 = sphi 0, %s190
      %s193 = sphi 0, %s192
      %s207 = sphi 0, %s193
      %s211 = sphi 0, %s211
      %s213 = sphi 0, %s211
      %s214 = sphi 0, %s213
      %s228 = sphi 0, %s214
      %s232 = sphi 0, %s232
      %s234 = sphi 0, %s232
      %s235 = sphi 0, %s234
      %s249 = sphi 0, %s235
      %s253 = sphi 0, %s253
      %s255 = sphi 0, %s253
      %s256 = sphi 0, %s255
      %s270 = sphi 0, %s256
      %s274 = sphi 0, %s274
      %s276 = sphi 0, %s274
      %s277 = sphi 0, %s276
      %s291 = sphi 0, %s277
      %s299 = sphi 0, %s301
      %s302 = sphi 0, %s299
      %s303 = sphi 0, %s302
      %s319 = sphi 0, %s303
    $region4: #{tpu_custom_call.1} parent=1 // loop_header_branch
      %23 = sbr.rel (%p21) target = $region8
    $region5: #{tpu_custom_call.1} parent=1 // loop_body
      %s25 = ssub.s32 %s20, 1
      %s26 = ssub.s32 %s20, 2
      %s33 = sadd.s32 1, %s28
      %p34 = scmp.ge.s32.totalorder %s33, 1
      %s35 = scalar_select %p34, 0, %s33
      %s36 = sadd.s32 1, %s27
      %s37 = scalar_select %p34, %s36, %s27
      %p38 = scmp.ge.s32.totalorder %s37, 2
      %s39 = scalar_select %p38, 0, %s37
      %s40 = ssub.s32 %s27, %s39
      %s41 = ssub.s32 %s28, %s35
      %s42 = sor.u32 %s40, %s41
      %p43 = scmp.eq.s32.totalorder %s42, 0
      %s45 = sadd.s32 %s44, 1
      %s46 = scalar_select %p43, %s44, %s45
      %p49 = pneg %p43
      %p50 = scmp.eq.s32.totalorder %s20, 1
      %p51 = por %p49, %p50
      %p52 = scmp.ne.s32.totalorder %s44, %s47
      %p53 = scmp.eq.s32.totalorder %s20, 0
      %p54 = por %p52, %p53
      %p55 = scmp.ne.s32.totalorder %s44, %s47
      %p56 = scmp.eq.s32.totalorder %s25, 1
      %p57 = por %p55, %p56
      %p58 = scmp.ne.s32.totalorder %s47, %s48
      %p59 = scmp.eq.s32.totalorder %s25, 0
      %p60 = por %p58, %p59
      %p61 = scmp.ne.s32.totalorder %s47, %s48
      %p62 = scmp.eq.s32.totalorder %s26, 1
      %p63 = por %p61, %p62
      %p65 = scmp.ne.s32.totalorder %s48, %s64
      %p66 = scmp.eq.s32.totalorder %s26, 0
      %p67 = por %p65, %p66
      %s68 = ssub.s32 %s27, %s39
      %p69 = scmp.eq.s32.totalorder %s68, 0
      %s71 = sadd.s32 %s70, 1
      %s72 = scalar_select %p69, %s70, %s71
      %p75 = pneg %p69
      %p76 = scmp.eq.s32.totalorder %s20, 1
      %p77 = por %p75, %p76
      %p78 = scmp.ne.s32.totalorder %s70, %s73
      %p79 = scmp.eq.s32.totalorder %s20, 0
      %p80 = por %p78, %p79
      %p81 = scmp.ne.s32.totalorder %s70, %s73
      %p82 = scmp.eq.s32.totalorder %s25, 1
      %p83 = por %p81, %p82
      %p84 = scmp.ne.s32.totalorder %s73, %s74
      %p85 = scmp.eq.s32.totalorder %s25, 0
      %p86 = por %p84, %p85
      %p87 = scmp.ne.s32.totalorder %s73, %s74
      %p88 = scmp.eq.s32.totalorder %s26, 1
      %p89 = por %p87, %p88
      %p91 = scmp.ne.s32.totalorder %s74, %s90
      %p92 = scmp.eq.s32.totalorder %s26, 0
      %p93 = por %p91, %p92
      %s94 = ssub.s32 %s27, %s39
      %p95 = scmp.eq.s32.totalorder %s94, 0
      %s97 = sadd.s32 %s96, 1
      %s98 = scalar_select %p95, %s96, %s97
      %p101 = pneg %p95
      %p102 = scmp.eq.s32.totalorder %s20, 1
      %p103 = por %p101, %p102
      %p104 = scmp.ne.s32.totalorder %s96, %s99
      %p105 = scmp.eq.s32.totalorder %s20, 0
      %p106 = por %p104, %p105
      %p107 = scmp.ne.s32.totalorder %s96, %s99
      %p108 = scmp.eq.s32.totalorder %s25, 1
      %p109 = por %p107, %p108
      %p110 = scmp.ne.s32.totalorder %s99, %s100
      %p111 = scmp.eq.s32.totalorder %s25, 0
      %p112 = por %p110, %p111
      %p113 = scmp.ne.s32.totalorder %s99, %s100
      %p114 = scmp.eq.s32.totalorder %s26, 1
      %p115 = por %p113, %p114
      %p117 = scmp.ne.s32.totalorder %s100, %s116
      %p118 = scmp.eq.s32.totalorder %s26, 0
      %p119 = por %p117, %p118
      %s120 = ssub.s32 %s27, %s39
      %s121 = ssub.s32 %s28, %s35
      %s122 = sor.u32 %s120, %s121
      %p123 = scmp.eq.s32.totalorder %s122, 0
      %s125 = sadd.s32 %s124, 1
      %s126 = scalar_select %p123, %s124, %s125
      %p129 = pneg %p123
      %p130 = scmp.eq.s32.totalorder %s20, 1
      %p131 = por %p129, %p130
      %p132 = scmp.ne.s32.totalorder %s124, %s127
      %p133 = scmp.eq.s32.totalorder %s20, 0
      %p134 = por %p132, %p133
      %p135 = scmp.ne.s32.totalorder %s124, %s127
      %p136 = scmp.eq.s32.totalorder %s25, 1
      %p137 = por %p135, %p136
      %p138 = scmp.ne.s32.totalorder %s127, %s128
      %p139 = scmp.eq.s32.totalorder %s25, 0
      %p140 = por %p138, %p139
      %p141 = scmp.ne.s32.totalorder %s127, %s128
      %p142 = scmp.eq.s32.totalorder %s26, 1
      %p143 = por %p141, %p142
      %p145 = scmp.ne.s32.totalorder %s128, %s144
      %p146 = scmp.eq.s32.totalorder %s26, 0
      %p147 = por %p145, %p146
      %s149 = sadd.s32 %s148, 1
      %p152 = scmp.eq.s32.totalorder %s20, 1
      %p153 = scmp.ne.s32.totalorder %s148, %s150
      %p154 = scmp.eq.s32.totalorder %s20, 0
      %p155 = por %p153, %p154
      %p156 = scmp.ne.s32.totalorder %s148, %s150
      %p157 = scmp.eq.s32.totalorder %s25, 1
      %p158 = por %p156, %p157
      %p159 = scmp.ne.s32.totalorder %s150, %s151
      %p160 = scmp.eq.s32.totalorder %s25, 0
      %p161 = por %p159, %p160
      %p162 = scmp.ne.s32.totalorder %s150, %s151
      %p163 = scmp.eq.s32.totalorder %s26, 1
      %p164 = por %p162, %p163
      %p166 = scmp.ne.s32.totalorder %s151, %s165
      %p167 = scmp.eq.s32.totalorder %s26, 0
      %p168 = por %p166, %p167
      %s170 = sadd.s32 %s169, 1
      %p173 = scmp.eq.s32.totalorder %s20, 1
      %p174 = scmp.ne.s32.totalorder %s169, %s171
      %p175 = scmp.eq.s32.totalorder %s20, 0
      %p176 = por %p174, %p175
      %p177 = scmp.ne.s32.totalorder %s169, %s171
      %p178 = scmp.eq.s32.totalorder %s25, 1
      %p179 = por %p177, %p178
      %p180 = scmp.ne.s32.totalorder %s171, %s172
      %p181 = scmp.eq.s32.totalorder %s25, 0
      %p182 = por %p180, %p181
      %p183 = scmp.ne.s32.totalorder %s171, %s172
      %p184 = scmp.eq.s32.totalorder %s26, 1
      %p185 = por %p183, %p184
      %p187 = scmp.ne.s32.totalorder %s172, %s186
      %p188 = scmp.eq.s32.totalorder %s26, 0
      %p189 = por %p187, %p188
      %s191 = sadd.s32 %s190, 1
      %p194 = scmp.eq.s32.totalorder %s20, 1
      %p195 = scmp.ne.s32.totalorder %s190, %s192
      %p196 = scmp.eq.s32.totalorder %s20, 0
      %p197 = por %p195, %p196
      %p198 = scmp.ne.s32.totalorder %s190, %s192
      %p199 = scmp.eq.s32.totalorder %s25, 1
      %p200 = por %p198, %p199
      %p201 = scmp.ne.s32.totalorder %s192, %s193
      %p202 = scmp.eq.s32.totalorder %s25, 0
      %p203 = por %p201, %p202
      %p204 = scmp.ne.s32.totalorder %s192, %s193
      %p205 = scmp.eq.s32.totalorder %s26, 1
      %p206 = por %p204, %p205
      %p208 = scmp.ne.s32.totalorder %s193, %s207
      %p209 = scmp.eq.s32.totalorder %s26, 0
      %p210 = por %p208, %p209
      %s212 = sadd.s32 %s211, 1
      %p215 = scmp.eq.s32.totalorder %s20, 1
      %p216 = scmp.ne.s32.totalorder %s211, %s213
      %p217 = scmp.eq.s32.totalorder %s20, 0
      %p218 = por %p216, %p217
      %p219 = scmp.ne.s32.totalorder %s211, %s213
      %p220 = scmp.eq.s32.totalorder %s25, 1
      %p221 = por %p219, %p220
      %p222 = scmp.ne.s32.totalorder %s213, %s214
      %p223 = scmp.eq.s32.totalorder %s25, 0
      %p224 = por %p222, %p223
      %p225 = scmp.ne.s32.totalorder %s213, %s214
      %p226 = scmp.eq.s32.totalorder %s26, 1
      %p227 = por %p225, %p226
      %p229 = scmp.ne.s32.totalorder %s214, %s228
      %p230 = scmp.eq.s32.totalorder %s26, 0
      %p231 = por %p229, %p230
      %s233 = sadd.s32 %s232, 1
      %p236 = scmp.eq.s32.totalorder %s20, 1
      %p237 = scmp.ne.s32.totalorder %s232, %s234
      %p238 = scmp.eq.s32.totalorder %s20, 0
      %p239 = por %p237, %p238
      %p240 = scmp.ne.s32.totalorder %s232, %s234
      %p241 = scmp.eq.s32.totalorder %s25, 1
      %p242 = por %p240, %p241
      %p243 = scmp.ne.s32.totalorder %s234, %s235
      %p244 = scmp.eq.s32.totalorder %s25, 0
      %p245 = por %p243, %p244
      %p246 = scmp.ne.s32.totalorder %s234, %s235
      %p247 = scmp.eq.s32.totalorder %s26, 1
      %p248 = por %p246, %p247
      %p250 = scmp.ne.s32.totalorder %s235, %s249
      %p251 = scmp.eq.s32.totalorder %s26, 0
      %p252 = por %p250, %p251
      %s254 = sadd.s32 %s253, 1
      %p257 = scmp.eq.s32.totalorder %s20, 1
      %p258 = scmp.ne.s32.totalorder %s253, %s255
      %p259 = scmp.eq.s32.totalorder %s20, 0
      %p260 = por %p258, %p259
      %p261 = scmp.ne.s32.totalorder %s253, %s255
      %p262 = scmp.eq.s32.totalorder %s25, 1
      %p263 = por %p261, %p262
      %p264 = scmp.ne.s32.totalorder %s255, %s256
      %p265 = scmp.eq.s32.totalorder %s25, 0
      %p266 = por %p264, %p265
      %p267 = scmp.ne.s32.totalorder %s255, %s256
      %p268 = scmp.eq.s32.totalorder %s26, 1
      %p269 = por %p267, %p268
      %p271 = scmp.ne.s32.totalorder %s256, %s270
      %p272 = scmp.eq.s32.totalorder %s26, 0
      %p273 = por %p271, %p272
      %s275 = sadd.s32 %s274, 1
      %p278 = scmp.eq.s32.totalorder %s20, 1
      %p279 = scmp.ne.s32.totalorder %s274, %s276
      %p280 = scmp.eq.s32.totalorder %s20, 0
      %p281 = por %p279, %p280
      %p282 = scmp.ne.s32.totalorder %s274, %s276
      %p283 = scmp.eq.s32.totalorder %s25, 1
      %p284 = por %p282, %p283
      %p285 = scmp.ne.s32.totalorder %s276, %s277
      %p286 = scmp.eq.s32.totalorder %s25, 0
      %p287 = por %p285, %p286
      %p288 = scmp.ne.s32.totalorder %s276, %s277
      %p289 = scmp.eq.s32.totalorder %s26, 1
      %p290 = por %p288, %p289
      %p292 = scmp.ne.s32.totalorder %s277, %s291
      %p293 = scmp.eq.s32.totalorder %s26, 0
      %p294 = por %p292, %p293
      %s295 = ssub.s32 %s27, %s39
      %s296 = ssub.s32 %s28, %s35
      %s297 = sor.u32 %s295, %s296
      %p298 = scmp.eq.s32.totalorder %s297, 0
      %s300 = sadd.s32 %s299, 1
      %s301 = scalar_select %p298, %s299, %s300
      %p304 = pneg %p298
      %p305 = scmp.eq.s32.totalorder %s20, 1
      %p306 = por %p304, %p305
      %p307 = scmp.ne.s32.totalorder %s299, %s302
      %p308 = scmp.eq.s32.totalorder %s20, 0
      %p309 = por %p307, %p308
      %p310 = scmp.ne.s32.totalorder %s299, %s302
      %p311 = scmp.eq.s32.totalorder %s25, 1
      %p312 = por %p310, %p311
      %p313 = scmp.ne.s32.totalorder %s302, %s303
      %p314 = scmp.eq.s32.totalorder %s25, 0
      %p315 = por %p313, %p314
      %p316 = scmp.ne.s32.totalorder %s302, %s303
      %p317 = scmp.eq.s32.totalorder %s26, 1
      %p318 = por %p316, %p317
      %p320 = scmp.ne.s32.totalorder %s303, %s319
      %p321 = scmp.eq.s32.totalorder %s26, 0
      %p322 = por %p320, %p321
      %p323 = scmp.le.s32.totalorder 1, %s20
      %p324 = scmp.lt.s32.totalorder %s20, 3
      %p325 = pnand %p323, %p324
      %p326 = pneg %p325
      // Predicated region
      $region9: #{tpu_custom_call.1} parent=5 // pred_check
        _
      $region10: #{tpu_custom_call.1} parent=5 // pred_check_branch
        %328 = sbr.rel (%p325) target = $region12
      $region11: #{tpu_custom_call.1} parent=5 // pred_region
        %s329 = ssub.s32 %s20, 1
        // Predicated region
        $region13: #{tpu_custom_call.1} parent=11 // pred_check
          %p330 = pneg %p161
        $region14: #{tpu_custom_call.1} parent=11 // pred_check_branch
          %332 = sbr.rel (%p330) target = $region16
        $region15: #{tpu_custom_call.1} parent=11 // pred_region
          _
        $region16: #{tpu_custom_call.1} parent=11 // pred_fallthru
          _
        // Predicated region
        $region17: #{tpu_custom_call.1} parent=11 // pred_check
          %p333 = pneg %p182
        $region18: #{tpu_custom_call.1} parent=11 // pred_check_branch
          %335 = sbr.rel (%p333) target = $region20
        $region19: #{tpu_custom_call.1} parent=11 // pred_region
          _
        $region20: #{tpu_custom_call.1} parent=11 // pred_fallthru
          _
        // Predicated region
        $region21: #{tpu_custom_call.1} parent=11 // pred_check
          %p336 = pneg %p203
        $region22: #{tpu_custom_call.1} parent=11 // pred_check_branch
          %338 = sbr.rel (%p336) target = $region24
        $region23: #{tpu_custom_call.1} parent=11 // pred_region
          _
        $region24: #{tpu_custom_call.1} parent=11 // pred_fallthru
          _
        // Predicated region
        $region25: #{tpu_custom_call.1} parent=11 // pred_check
          %p339 = pneg %p224
        $region26: #{tpu_custom_call.1} parent=11 // pred_check_branch
          %341 = sbr.rel (%p339) target = $region28
        $region27: #{tpu_custom_call.1} parent=11 // pred_region
          _
        $region28: #{tpu_custom_call.1} parent=11 // pred_fallthru
          _
        // Predicated region
        $region29: #{tpu_custom_call.1} parent=11 // pred_check
          %p342 = pneg %p245
        $region30: #{tpu_custom_call.1} parent=11 // pred_check_branch
          %344 = sbr.rel (%p342) target = $region32
        $region31: #{tpu_custom_call.1} parent=11 // pred_region
          _
        $region32: #{tpu_custom_call.1} parent=11 // pred_fallthru
          _
        // Predicated region
        $region33: #{tpu_custom_call.1} parent=11 // pred_check
          %p345 = pneg %p266
        $region34: #{tpu_custom_call.1} parent=11 // pred_check_branch
          %347 = sbr.rel (%p345) target = $region36
        $region35: #{tpu_custom_call.1} parent=11 // pred_region
          _
        $region36: #{tpu_custom_call.1} parent=11 // pred_fallthru
          _
        // Predicated region
        $region37: #{tpu_custom_call.1} parent=11 // pred_check
          %p348 = pneg %p287
        $region38: #{tpu_custom_call.1} parent=11 // pred_check_branch
          %350 = sbr.rel (%p348) target = $region40
        $region39: #{tpu_custom_call.1} parent=11 // pred_region
          _
        $region40: #{tpu_custom_call.1} parent=11 // pred_fallthru
          _
      $region12: #{tpu_custom_call.1} parent=5 // pred_fallthru
        _
      %p351 = scmp.lt.s32.totalorder %s20, 2
      // Predicated region
      $region41: #{tpu_custom_call.1} parent=5 // pred_check
        %p352 = pneg %p351
      $region42: #{tpu_custom_call.1} parent=5 // pred_check_branch
        %354 = sbr.rel (%p352) target = $region44
      $region43: #{tpu_custom_call.1} parent=5 // pred_region
        // Predicated region
        $region45: #{tpu_custom_call.1} parent=43 // pred_check
          %p355 = pneg %p54
        $region46: #{tpu_custom_call.1} parent=43 // pred_check_branch
          %357 = sbr.rel (%p355) target = $region48
        $region47: #{tpu_custom_call.1} parent=43 // pred_region
          %p358 = scmp.lt.s32.totalorder %s27, 1
          %s359 = scalar_select %p358, %s27, 1
          %p360 = scmp.lt.s32.totalorder %s28, 0
          %s361 = scalar_select %p360, %s28, 0
          %s362 = sadd.s32 %s361, %s359
          %s363 = smul.addr %s362, 4
          %s364 = scalar_lea.vmem %s0, %s363
        $region48: #{tpu_custom_call.1} parent=43 // pred_fallthru
          _
        // Predicated region
        $region49: #{tpu_custom_call.1} parent=43 // pred_check
          %p365 = pneg %p80
        $region50: #{tpu_custom_call.1} parent=43 // pred_check_branch
          %367 = sbr.rel (%p365) target = $region52
        $region51: #{tpu_custom_call.1} parent=43 // pred_region
          %p368 = scmp.lt.s32.totalorder %s27, 1
          %s369 = scalar_select %p368, %s27, 1
          %s370 = smul.addr %s369, 16
          %s371 = smul.addr %s370, 8
          %s372 = scalar_lea.vmem %s1, %s371
        $region52: #{tpu_custom_call.1} parent=43 // pred_fallthru
          _
        // Predicated region
        $region53: #{tpu_custom_call.1} parent=43 // pred_check
          %p373 = pneg %p106
        $region54: #{tpu_custom_call.1} parent=43 // pred_check_branch
          %375 = sbr.rel (%p373) target = $region56
        $region55: #{tpu_custom_call.1} parent=43 // pred_region
          %p376 = scmp.lt.s32.totalorder %s27, 1
          %s377 = scalar_select %p376, %s27, 1
          %s378 = smul.addr %s377, 8
          %s379 = scalar_lea.vmem %s2, %s378
        $region56: #{tpu_custom_call.1} parent=43 // pred_fallthru
          _
        // Predicated region
        $region57: #{tpu_custom_call.1} parent=43 // pred_check
          %p380 = pneg %p134
        $region58: #{tpu_custom_call.1} parent=43 // pred_check_branch
          %382 = sbr.rel (%p380) target = $region60
        $region59: #{tpu_custom_call.1} parent=43 // pred_region
          %p383 = scmp.lt.s32.totalorder %s27, 1
          %s384 = scalar_select %p383, %s27, 1
          %p385 = scmp.lt.s32.totalorder %s28, 0
          %s386 = scalar_select %p385, %s28, 0
          %s387 = sadd.s32 %s386, %s384
          %s388 = smul.addr %s387, 4
          %s389 = scalar_lea.vmem %s3, %s388
        $region60: #{tpu_custom_call.1} parent=43 // pred_fallthru
          _
      $region44: #{tpu_custom_call.1} parent=5 // pred_fallthru
        _
      %p390 = scmp.le.s32.totalorder 1, %s20
      %p391 = scmp.lt.s32.totalorder %s20, 3
      %p392 = pnand %p390, %p391
      %p393 = pneg %p392
      // Predicated region
      $region61: #{tpu_custom_call.1} parent=5 // pred_check
        _
      $region62: #{tpu_custom_call.1} parent=5 // pred_check_branch
        %395 = sbr.rel (%p392) target = $region64
      $region63: #{tpu_custom_call.1} parent=5 // pred_region
        %s396 = ssub.s32 %s20, 1
        %p397 = scmp.lt.s32.totalorder %s29, 1
        %s398 = scalar_select %p397, %s29, 1
        %p399 = scmp.lt.s32.totalorder %s30, 0
        %s400 = scalar_select %p399, %s30, 0
        %s401 = sadd.s32 %s400, %s398
        %s402 = smul.addr %s401, 4
        %s403 = scalar_lea.vmem %s0, %s402
        %p404 = pneg %p60
        %p405 = pneg %p57
        %p406 = scmp.lt.s32.totalorder %s29, 1
        %s407 = scalar_select %p406, %s29, 1
        %s408 = smul.addr %s407, 16
        %s409 = smul.addr %s408, 8
        %s410 = scalar_lea.vmem %s1, %s409
        %p411 = pneg %p86
        %p412 = pneg %p83
        %p413 = scmp.lt.s32.totalorder %s29, 1
        %s414 = scalar_select %p413, %s29, 1
        %s415 = smul.addr %s414, 8
        %s416 = scalar_lea.vmem %s2, %s415
        %p417 = pneg %p112
        %p418 = pneg %p109
        %p419 = scmp.lt.s32.totalorder %s29, 1
        %s420 = scalar_select %p419, %s29, 1
        %p421 = scmp.lt.s32.totalorder %s30, 0
        %s422 = scalar_select %p421, %s30, 0
        %s423 = sadd.s32 %s422, %s420
        %s424 = smul.addr %s423, 4
        %s425 = scalar_lea.vmem %s3, %s424
        %p426 = pneg %p140
        %p427 = pneg %p137
        %p428 = pneg %p161
        %p429 = pneg %p158
        %p430 = pneg %p182
        %p431 = pneg %p179
        %p432 = pneg %p203
        %p433 = pneg %p200
        %p434 = pneg %p224
        %p435 = pneg %p221
        %p436 = pneg %p245
        %p437 = pneg %p242
        %p438 = pneg %p266
        %p439 = pneg %p263
        %p440 = pneg %p287
        %p441 = pneg %p284
        %p442 = pneg %p315
        %p443 = pneg %p312
        %s444 = sand.u32 %s302, 1
        %s445 = scalar_lea.sflag [#allocation3], %s444
        %s446 = sand.u32 %s302, 1
        %s447 = smul.addr %s446, 16
        %s448 = scalar_lea.vmem [#allocation2], %s447
        %p449 = scmp.lt.s32.totalorder %s29, 1
        %s450 = scalar_select %p449, %s29, 1
        %p451 = scmp.lt.s32.totalorder %s30, 0
        %s452 = scalar_select %p451, %s30, 0
        %s453 = sadd.s32 %s452, %s450
        %s454 = smul.addr %s453, 4
        %s455 = scalar_lea.vmem %s0, %s454
        %p456 = scmp.lt.s32.totalorder %s29, 1
        %s457 = scalar_select %p456, %s29, 1
        %s458 = smul.addr %s457, 16
        %s459 = smul.addr %s458, 8
        %s460 = scalar_lea.vmem %s1, %s459
        %p461 = scmp.lt.s32.totalorder %s29, 1
        %s462 = scalar_select %p461, %s29, 1
        %s463 = smul.addr %s462, 8
        %s464 = scalar_lea.vmem %s2, %s463
        %p465 = scmp.lt.s32.totalorder %s29, 1
        %s466 = scalar_select %p465, %s29, 1
        %p467 = scmp.lt.s32.totalorder %s30, 0
        %s468 = scalar_select %p467, %s30, 0
        %s469 = sadd.s32 %s468, %s466
        %s470 = smul.addr %s469, 4
        %s471 = scalar_lea.vmem %s3, %s470
        %v472 = vld [vmem:[%s455] sm:$0x7]
        %v473 = vld [vmem:[%s460] sm:$0xff]
        %v474 = vld [vmem:[%s460 + $0x8] sm:$0xff]
        %v475 = vld [vmem:[%s460 + $0x10] sm:$0xff]
        %v476 = vld [vmem:[%s460 + $0x18] sm:$0xff]
        %v477 = vld [vmem:[%s460 + $0x20] sm:$0xff]
        %v478 = vld [vmem:[%s460 + $0x28] sm:$0xff]
        %v479 = vld [vmem:[%s460 + $0x30] sm:$0xff]
        %v480 = vld [vmem:[%s460 + $0x38] sm:$0xff]
        %v481 = vld [vmem:[%s460 + $0x40] sm:$0xff]
        %v482 = vld [vmem:[%s460 + $0x48] sm:$0xff]
        %v483 = vld [vmem:[%s460 + $0x50] sm:$0xff]
        %v484 = vld [vmem:[%s460 + $0x58] sm:$0xff]
        %v485 = vld [vmem:[%s460 + $0x60] sm:$0xff]
        %v486 = vld [vmem:[%s460 + $0x68] sm:$0xff]
        %v487 = vld [vmem:[%s460 + $0x70] sm:$0xff]
        %v488 = vld [vmem:[%s460 + $0x78] sm:$0xff]
        %490 = vset.pattern.permute.xlu0 0
        %491 = vperm.xlu0 %490, %v473
        %v492 = vpop.permute.xlu0 %491
        %495 = vset.pattern.permute.xlu0 0
        %496 = vperm.xlu0 %495, %v474
        %v497 = vpop.permute.xlu0 %496
        %500 = vset.pattern.permute.xlu0 0
        %501 = vperm.xlu0 %500, %v475
        %v502 = vpop.permute.xlu0 %501
        %505 = vset.pattern.permute.xlu0 0
        %506 = vperm.xlu0 %505, %v476
        %v507 = vpop.permute.xlu0 %506
        %510 = vset.pattern.permute.xlu0 0
        %511 = vperm.xlu0 %510, %v477
        %v512 = vpop.permute.xlu0 %511
        %515 = vset.pattern.permute.xlu0 0
        %516 = vperm.xlu0 %515, %v478
        %v517 = vpop.permute.xlu0 %516
        %520 = vset.pattern.permute.xlu0 0
        %521 = vperm.xlu0 %520, %v479
        %v522 = vpop.permute.xlu0 %521
        %525 = vset.pattern.permute.xlu0 0
        %526 = vperm.xlu0 %525, %v480
        %v527 = vpop.permute.xlu0 %526
        %530 = vset.pattern.permute.xlu0 0
        %531 = vperm.xlu0 %530, %v481
        %v532 = vpop.permute.xlu0 %531
        %535 = vset.pattern.permute.xlu0 0
        %536 = vperm.xlu0 %535, %v482
        %v537 = vpop.permute.xlu0 %536
        %540 = vset.pattern.permute.xlu0 0
        %541 = vperm.xlu0 %540, %v483
        %v542 = vpop.permute.xlu0 %541
        %545 = vset.pattern.permute.xlu0 0
        %546 = vperm.xlu0 %545, %v484
        %v547 = vpop.permute.xlu0 %546
        %550 = vset.pattern.permute.xlu0 0
        %551 = vperm.xlu0 %550, %v485
        %v552 = vpop.permute.xlu0 %551
        %555 = vset.pattern.permute.xlu0 0
        %556 = vperm.xlu0 %555, %v486
        %v557 = vpop.permute.xlu0 %556
        %560 = vset.pattern.permute.xlu0 0
        %561 = vperm.xlu0 %560, %v487
        %v562 = vpop.permute.xlu0 %561
        %565 = vset.pattern.permute.xlu0 0
        %566 = vperm.xlu0 %565, %v488
        %v567 = vpop.permute.xlu0 %566
        %v569 = vperm.slane %v472, 0
        %v570 = vsub.f32 %v492, %v569
        %v571 = vsub.f32 %v497, %v569
        %v572 = vsub.f32 %v502, %v569
        %v573 = vsub.f32 %v507, %v569
        %v574 = vsub.f32 %v512, %v569
        %v575 = vsub.f32 %v517, %v569
        %v576 = vsub.f32 %v522, %v569
        %v577 = vsub.f32 %v527, %v569
        %v578 = vsub.f32 %v532, %v569
        %v579 = vsub.f32 %v537, %v569
        %v580 = vsub.f32 %v542, %v569
        %v581 = vsub.f32 %v547, %v569
        %v582 = vsub.f32 %v552, %v569
        %v583 = vsub.f32 %v557, %v569
        %v584 = vsub.f32 %v562, %v569
        %v585 = vsub.f32 %v567, %v569
        %v586 = vmul.f32 %v570, %v570
        %v587 = vmul.f32 %v571, %v571
        %v588 = vmul.f32 %v572, %v572
        %v589 = vmul.f32 %v573, %v573
        %v590 = vmul.f32 %v574, %v574
        %v591 = vmul.f32 %v575, %v575
        %v592 = vmul.f32 %v576, %v576
        %v593 = vmul.f32 %v577, %v577
        %v594 = vmul.f32 %v578, %v578
        %v595 = vmul.f32 %v579, %v579
        %v596 = vmul.f32 %v580, %v580
        %v597 = vmul.f32 %v581, %v581
        %v598 = vmul.f32 %v582, %v582
        %v599 = vmul.f32 %v583, %v583
        %v600 = vmul.f32 %v584, %v584
        %v601 = vmul.f32 %v585, %v585
        %v602 = vadd.f32 %v586, 0.0
        %v603 = vadd.f32 %v587, 0.0
        %v604 = vadd.f32 %v588, 0.0
        %v605 = vadd.f32 %v589, 0.0
        %v606 = vadd.f32 %v590, 0.0
        %v607 = vadd.f32 %v591, 0.0
        %v608 = vadd.f32 %v592, 0.0
        %v609 = vadd.f32 %v593, 0.0
        %v610 = vadd.f32 %v594, 0.0
        %v611 = vadd.f32 %v595, 0.0
        %v612 = vadd.f32 %v596, 0.0
        %v613 = vadd.f32 %v597, 0.0
        %v614 = vadd.f32 %v598, 0.0
        %v615 = vadd.f32 %v599, 0.0
        %v616 = vadd.f32 %v600, 0.0
        %v617 = vadd.f32 %v601, 0.0
        %618 = vset.pattern.permute.xlu0 1
        %619 = vperm.xlu0 %618, %v473
        %v620 = vpop.permute.xlu0 %619
        %622 = vset.pattern.permute.xlu0 1
        %623 = vperm.xlu0 %622, %v474
        %v624 = vpop.permute.xlu0 %623
        %626 = vset.pattern.permute.xlu0 1
        %627 = vperm.xlu0 %626, %v475
        %v628 = vpop.permute.xlu0 %627
        %630 = vset.pattern.permute.xlu0 1
        %631 = vperm.xlu0 %630, %v476
        %v632 = vpop.permute.xlu0 %631
        %634 = vset.pattern.permute.xlu0 1
        %635 = vperm.xlu0 %634, %v477
        %v636 = vpop.permute.xlu0 %635
        %638 = vset.pattern.permute.xlu0 1
        %639 = vperm.xlu0 %638, %v478
        %v640 = vpop.permute.xlu0 %639
        %642 = vset.pattern.permute.xlu0 1
        %643 = vperm.xlu0 %642, %v479
        %v644 = vpop.permute.xlu0 %643
        %646 = vset.pattern.permute.xlu0 1
        %647 = vperm.xlu0 %646, %v480
        %v648 = vpop.permute.xlu0 %647
        %650 = vset.pattern.permute.xlu0 1
        %651 = vperm.xlu0 %650, %v481
        %v652 = vpop.permute.xlu0 %651
        %654 = vset.pattern.permute.xlu0 1
        %655 = vperm.xlu0 %654, %v482
        %v656 = vpop.permute.xlu0 %655
        %658 = vset.pattern.permute.xlu0 1
        %659 = vperm.xlu0 %658, %v483
        %v660 = vpop.permute.xlu0 %659
        %662 = vset.pattern.permute.xlu0 1
        %663 = vperm.xlu0 %662, %v484
        %v664 = vpop.permute.xlu0 %663
        %666 = vset.pattern.permute.xlu0 1
        %667 = vperm.xlu0 %666, %v485
        %v668 = vpop.permute.xlu0 %667
        %670 = vset.pattern.permute.xlu0 1
        %671 = vperm.xlu0 %670, %v486
        %v672 = vpop.permute.xlu0 %671
        %674 = vset.pattern.permute.xlu0 1
        %675 = vperm.xlu0 %674, %v487
        %v676 = vpop.permute.xlu0 %675
        %678 = vset.pattern.permute.xlu0 1
        %679 = vperm.xlu0 %678, %v488
        %v680 = vpop.permute.xlu0 %679
        %v682 = vperm.slane %v472, 1
        %v683 = vsub.f32 %v620, %v682
        %v684 = vsub.f32 %v624, %v682
        %v685 = vsub.f32 %v628, %v682
        %v686 = vsub.f32 %v632, %v682
        %v687 = vsub.f32 %v636, %v682
        %v688 = vsub.f32 %v640, %v682
        %v689 = vsub.f32 %v644, %v682
        %v690 = vsub.f32 %v648, %v682
        %v691 = vsub.f32 %v652, %v682
        %v692 = vsub.f32 %v656, %v682
        %v693 = vsub.f32 %v660, %v682
        %v694 = vsub.f32 %v664, %v682
        %v695 = vsub.f32 %v668, %v682
        %v696 = vsub.f32 %v672, %v682
        %v697 = vsub.f32 %v676, %v682
        %v698 = vsub.f32 %v680, %v682
        %v699 = vmul.f32 %v683, %v683
        %v700 = vmul.f32 %v684, %v684
        %v701 = vmul.f32 %v685, %v685
        %v702 = vmul.f32 %v686, %v686
        %v703 = vmul.f32 %v687, %v687
        %v704 = vmul.f32 %v688, %v688
        %v705 = vmul.f32 %v689, %v689
        %v706 = vmul.f32 %v690, %v690
        %v707 = vmul.f32 %v691, %v691
        %v708 = vmul.f32 %v692, %v692
        %v709 = vmul.f32 %v693, %v693
        %v710 = vmul.f32 %v694, %v694
        %v711 = vmul.f32 %v695, %v695
        %v712 = vmul.f32 %v696, %v696
        %v713 = vmul.f32 %v697, %v697
        %v714 = vmul.f32 %v698, %v698
        %v715 = vadd.f32 %v602, %v699
        %v716 = vadd.f32 %v603, %v700
        %v717 = vadd.f32 %v604, %v701
        %v718 = vadd.f32 %v605, %v702
        %v719 = vadd.f32 %v606, %v703
        %v720 = vadd.f32 %v607, %v704
        %v721 = vadd.f32 %v608, %v705
        %v722 = vadd.f32 %v609, %v706
        %v723 = vadd.f32 %v610, %v707
        %v724 = vadd.f32 %v611, %v708
        %v725 = vadd.f32 %v612, %v709
        %v726 = vadd.f32 %v613, %v710
        %v727 = vadd.f32 %v614, %v711
        %v728 = vadd.f32 %v615, %v712
        %v729 = vadd.f32 %v616, %v713
        %v730 = vadd.f32 %v617, %v714
        %731 = vset.pattern.permute.xlu0 2
        %732 = vperm.xlu0 %731, %v473
        %v733 = vpop.permute.xlu0 %732
        %735 = vset.pattern.permute.xlu0 2
        %736 = vperm.xlu0 %735, %v474
        %v737 = vpop.permute.xlu0 %736
        %739 = vset.pattern.permute.xlu0 2
        %740 = vperm.xlu0 %739, %v475
        %v741 = vpop.permute.xlu0 %740
        %743 = vset.pattern.permute.xlu0 2
        %744 = vperm.xlu0 %743, %v476
        %v745 = vpop.permute.xlu0 %744
        %747 = vset.pattern.permute.xlu0 2
        %748 = vperm.xlu0 %747, %v477
        %v749 = vpop.permute.xlu0 %748
        %751 = vset.pattern.permute.xlu0 2
        %752 = vperm.xlu0 %751, %v478
        %v753 = vpop.permute.xlu0 %752
        %755 = vset.pattern.permute.xlu0 2
        %756 = vperm.xlu0 %755, %v479
        %v757 = vpop.permute.xlu0 %756
        %759 = vset.pattern.permute.xlu0 2
        %760 = vperm.xlu0 %759, %v480
        %v761 = vpop.permute.xlu0 %760
        %763 = vset.pattern.permute.xlu0 2
        %764 = vperm.xlu0 %763, %v481
        %v765 = vpop.permute.xlu0 %764
        %767 = vset.pattern.permute.xlu0 2
        %768 = vperm.xlu0 %767, %v482
        %v769 = vpop.permute.xlu0 %768
        %771 = vset.pattern.permute.xlu0 2
        %772 = vperm.xlu0 %771, %v483
        %v773 = vpop.permute.xlu0 %772
        %775 = vset.pattern.permute.xlu0 2
        %776 = vperm.xlu0 %775, %v484
        %v777 = vpop.permute.xlu0 %776
        %779 = vset.pattern.permute.xlu0 2
        %780 = vperm.xlu0 %779, %v485
        %v781 = vpop.permute.xlu0 %780
        %783 = vset.pattern.permute.xlu0 2
        %784 = vperm.xlu0 %783, %v486
        %v785 = vpop.permute.xlu0 %784
        %787 = vset.pattern.permute.xlu0 2
        %788 = vperm.xlu0 %787, %v487
        %v789 = vpop.permute.xlu0 %788
        %791 = vset.pattern.permute.xlu0 2
        %792 = vperm.xlu0 %791, %v488
        %v793 = vpop.permute.xlu0 %792
        %v795 = vperm.slane %v472, 2
        %v796 = vsub.f32 %v733, %v795
        %v797 = vsub.f32 %v737, %v795
        %v798 = vsub.f32 %v741, %v795
        %v799 = vsub.f32 %v745, %v795
        %v800 = vsub.f32 %v749, %v795
        %v801 = vsub.f32 %v753, %v795
        %v802 = vsub.f32 %v757, %v795
        %v803 = vsub.f32 %v761, %v795
        %v804 = vsub.f32 %v765, %v795
        %v805 = vsub.f32 %v769, %v795
        %v806 = vsub.f32 %v773, %v795
        %v807 = vsub.f32 %v777, %v795
        %v808 = vsub.f32 %v781, %v795
        %v809 = vsub.f32 %v785, %v795
        %v810 = vsub.f32 %v789, %v795
        %v811 = vsub.f32 %v793, %v795
        %v812 = vmul.f32 %v796, %v796
        %v813 = vmul.f32 %v797, %v797
        %v814 = vmul.f32 %v798, %v798
        %v815 = vmul.f32 %v799, %v799
        %v816 = vmul.f32 %v800, %v800
        %v817 = vmul.f32 %v801, %v801
        %v818 = vmul.f32 %v802, %v802
        %v819 = vmul.f32 %v803, %v803
        %v820 = vmul.f32 %v804, %v804
        %v821 = vmul.f32 %v805, %v805
        %v822 = vmul.f32 %v806, %v806
        %v823 = vmul.f32 %v807, %v807
        %v824 = vmul.f32 %v808, %v808
        %v825 = vmul.f32 %v809, %v809
        %v826 = vmul.f32 %v810, %v810
        %v827 = vmul.f32 %v811, %v811
        %v828 = vadd.f32 %v715, %v812
        %v829 = vadd.f32 %v716, %v813
        %v830 = vadd.f32 %v717, %v814
        %v831 = vadd.f32 %v718, %v815
        %v832 = vadd.f32 %v719, %v816
        %v833 = vadd.f32 %v720, %v817
        %v834 = vadd.f32 %v721, %v818
        %v835 = vadd.f32 %v722, %v819
        %v836 = vadd.f32 %v723, %v820
        %v837 = vadd.f32 %v724, %v821
        %v838 = vadd.f32 %v725, %v822
        %v839 = vadd.f32 %v726, %v823
        %v840 = vadd.f32 %v727, %v824
        %v841 = vadd.f32 %v728, %v825
        %v842 = vadd.f32 %v729, %v826
        %v843 = vadd.f32 %v730, %v827
        %v844 = vlaneseq
        %v845 = vshrl.u32 %v844, 7
        %v846 = vadd.s32 %v845, 8
        %v847 = vadd.s32 %v845, 16
        %v848 = vadd.s32 %v845, 24
        %v849 = vadd.s32 %v845, 32
        %v850 = vadd.s32 %v845, 40
        %v851 = vadd.s32 %v845, 48
        %v852 = vadd.s32 %v845, 56
        %v853 = vadd.s32 %v845, 64
        %v854 = vadd.s32 %v845, 72
        %v855 = vadd.s32 %v845, 80
        %v856 = vadd.s32 %v845, 88
        %v857 = vadd.s32 %v845, 96
        %v858 = vadd.s32 %v845, 104
        %v859 = vadd.s32 %v845, 112
        %v860 = vadd.s32 %v845, 120
        %v861 = vmin.f32 %v828, %v832
        %v862 = vmin.f32 %v829, %v833
        %v863 = vmin.f32 %v830, %v834
        %v864 = vmin.f32 %v831, %v835
        %v865 = vmin.f32 %v861, %v836
        %v866 = vmin.f32 %v862, %v837
        %v867 = vmin.f32 %v863, %v838
        %v868 = vmin.f32 %v864, %v839
        %v869 = vmin.f32 %v865, %v840
        %v870 = vmin.f32 %v866, %v841
        %v871 = vmin.f32 %v867, %v842
        %v872 = vmin.f32 %v868, %v843
        %v873 = vmin.f32 %v869, %v870
        %v874 = vmin.f32 %v871, %v872
        %v875 = vmin.f32 %v873, %v874
        %v876 = vrot.slane %v875, 4
        %v877 = vmin.f32 %v875, %v876
        %v878 = vrot.slane %v877, 2
        %v879 = vmin.f32 %v877, %v878
        %v880 = vrot.slane %v879, 1
        %v881 = vmin.f32 %v879, %v880
        %vm882 = vcmp.le.f32.partialorder %v828, %v881
        %vm883 = vcmp.le.f32.partialorder %v829, %v881
        %vm884 = vcmp.le.f32.partialorder %v830, %v881
        %vm885 = vcmp.le.f32.partialorder %v831, %v881
        %vm886 = vcmp.le.f32.partialorder %v832, %v881
        %vm887 = vcmp.le.f32.partialorder %v833, %v881
        %vm888 = vcmp.le.f32.partialorder %v834, %v881
        %vm889 = vcmp.le.f32.partialorder %v835, %v881
        %vm890 = vcmp.le.f32.partialorder %v836, %v881
        %vm891 = vcmp.le.f32.partialorder %v837, %v881
        %vm892 = vcmp.le.f32.partialorder %v838, %v881
        %vm893 = vcmp.le.f32.partialorder %v839, %v881
        %vm894 = vcmp.le.f32.partialorder %v840, %v881
        %vm895 = vcmp.le.f32.partialorder %v841, %v881
        %vm896 = vcmp.le.f32.partialorder %v842, %v881
        %vm897 = vcmp.le.f32.partialorder %v843, %v881
        %v898 = vsel %vm882, %v845, 128
        %v899 = vsel %vm883, %v846, 128
        %v900 = vsel %vm884, %v847, 128
        %v901 = vsel %vm885, %v848, 128
        %v902 = vsel %vm886, %v849, 128
        %v903 = vsel %vm887, %v850, 128
        %v904 = vsel %vm888, %v851, 128
        %v905 = vsel %vm889, %v852, 128
        %v906 = vsel %vm890, %v853, 128
        %v907 = vsel %vm891, %v854, 128
        %v908 = vsel %vm892, %v855, 128
        %v909 = vsel %vm893, %v856, 128
        %v910 = vsel %vm894, %v857, 128
        %v911 = vsel %vm895, %v858, 128
        %v912 = vsel %vm896, %v859, 128
        %v913 = vsel %vm897, %v860, 128
        %vm914 = vcmp.lt.s32.totalorder %v898, %v902
        %v915 = vsel %vm914, %v898, %v902
        %vm916 = vcmp.lt.s32.totalorder %v899, %v903
        %v917 = vsel %vm916, %v899, %v903
        %vm918 = vcmp.lt.s32.totalorder %v900, %v904
        %v919 = vsel %vm918, %v900, %v904
        %vm920 = vcmp.lt.s32.totalorder %v901, %v905
        %v921 = vsel %vm920, %v901, %v905
        %vm922 = vcmp.lt.s32.totalorder %v915, %v906
        %v923 = vsel %vm922, %v915, %v906
        %vm924 = vcmp.lt.s32.totalorder %v917, %v907
        %v925 = vsel %vm924, %v917, %v907
        %vm926 = vcmp.lt.s32.totalorder %v919, %v908
        %v927 = vsel %vm926, %v919, %v908
        %vm928 = vcmp.lt.s32.totalorder %v921, %v909
        %v929 = vsel %vm928, %v921, %v909
        %vm930 = vcmp.lt.s32.totalorder %v923, %v910
        %v931 = vsel %vm930, %v923, %v910
        %vm932 = vcmp.lt.s32.totalorder %v925, %v911
        %v933 = vsel %vm932, %v925, %v911
        %vm934 = vcmp.lt.s32.totalorder %v927, %v912
        %v935 = vsel %vm934, %v927, %v912
        %vm936 = vcmp.lt.s32.totalorder %v929, %v913
        %v937 = vsel %vm936, %v929, %v913
        %vm938 = vcmp.lt.s32.totalorder %v931, %v933
        %v939 = vsel %vm938, %v931, %v933
        %vm940 = vcmp.lt.s32.totalorder %v935, %v937
        %v941 = vsel %vm940, %v935, %v937
        %vm942 = vcmp.lt.s32.totalorder %v939, %v941
        %v943 = vsel %vm942, %v939, %v941
        %v944 = vrot.slane %v943, 4
        %vm945 = vcmp.lt.s32.totalorder %v943, %v944
        %v946 = vsel %vm945, %v943, %v944
        %v947 = vrot.slane %v946, 2
        %vm948 = vcmp.lt.s32.totalorder %v946, %v947
        %v949 = vsel %vm948, %v946, %v947
        %v950 = vrot.slane %v949, 1
        %vm951 = vcmp.lt.s32.totalorder %v949, %v950
        %v952 = vsel %vm951, %v949, %v950
        %vm953 = vcmp.eq.s32.totalorder %v845, %v952
        %vm954 = vcmp.eq.s32.totalorder %v846, %v952
        %vm955 = vcmp.eq.s32.totalorder %v847, %v952
        %vm956 = vcmp.eq.s32.totalorder %v848, %v952
        %vm957 = vcmp.eq.s32.totalorder %v849, %v952
        %vm958 = vcmp.eq.s32.totalorder %v850, %v952
        %vm959 = vcmp.eq.s32.totalorder %v851, %v952
        %vm960 = vcmp.eq.s32.totalorder %v852, %v952
        %vm961 = vcmp.eq.s32.totalorder %v853, %v952
        %vm962 = vcmp.eq.s32.totalorder %v854, %v952
        %vm963 = vcmp.eq.s32.totalorder %v855, %v952
        %vm964 = vcmp.eq.s32.totalorder %v856, %v952
        %vm965 = vcmp.eq.s32.totalorder %v857, %v952
        %vm966 = vcmp.eq.s32.totalorder %v858, %v952
        %vm967 = vcmp.eq.s32.totalorder %v859, %v952
        %vm968 = vcmp.eq.s32.totalorder %v860, %v952
        %v969 = vrsqrt.pop %v881
        %v970 = vmul.f32 %v969, %v881
        %v971 = vmul.f32 %v970, %v969
        %v972 = vmul.f32 0.5, %v971
        %v973 = vsub.f32 1.5, %v972
        %v974 = vmul.f32 %v969, %v973
        %v975 = vmul.f32 %v881, %v974
        %vm976 = vcmp.eq.f32.partialorder %v881, inf
        %v977 = vsel %vm976, %v881, %v975
        %vm978 = vcmp.eq.f32.partialorder %v881, 0.0
        %v979 = vand.u32 %v881, 2147483648
        %v980 = vsel %vm978, %v979, %v977
        %v981 = vadd.f32 %v980, 1e-06
        %v982 = vrcp.pop %v981
        %v983 = vmul.f32 %v981, %v982
        %v984 = vsub.f32 1.0, %v983
        %v985 = vmul.f32 %v982, %v984
        %v986 = vadd.f32 %v982, %v985
        %vm987 = vweird.f32 %v981
        %vm988 = vweird.f32 %v982
        %vm989 = vmor %vm987, %vm988
        %v990 = vsel %vm989, %v982, %v986
        %v991 = vand.u32 2147483647, %v981
        %vm992 = vcmp.eq.f32.partialorder %v991, 8.507059e+37
        %v993 = vand.u32 %v981, 2147483648
        %v994 = vor.u32 1.1754944e-38, %v993
        %v995 = vsel %vm992, %v994, %v990
        %v996 = vmul.f32 1.0, %v995
        %v997 = vsel %vm953, %v996, 0.0
        %v998 = vsel %vm954, %v996, 0.0
        %v999 = vsel %vm955, %v996, 0.0
        %v1000 = vsel %vm956, %v996, 0.0
        %v1001 = vsel %vm957, %v996, 0.0
        %v1002 = vsel %vm958, %v996, 0.0
        %v1003 = vsel %vm959, %v996, 0.0
        %v1004 = vsel %vm960, %v996, 0.0
        %v1005 = vsel %vm961, %v996, 0.0
        %v1006 = vsel %vm962, %v996, 0.0
        %v1007 = vsel %vm963, %v996, 0.0
        %v1008 = vsel %vm964, %v996, 0.0
        %v1009 = vsel %vm965, %v996, 0.0
        %v1010 = vsel %vm966, %v996, 0.0
        %v1011 = vsel %vm967, %v996, 0.0
        %v1012 = vsel %vm968, %v996, 0.0
        %v1013 = vadd.f32 %v997, 0.0
        %v1014 = vadd.f32 %v998, 0.0
        %v1015 = vadd.f32 %v999, 0.0
        %v1016 = vadd.f32 %v1000, 0.0
        %v1017 = vadd.f32 %v1001, 0.0
        %v1018 = vadd.f32 %v1002, 0.0
        %v1019 = vadd.f32 %v1003, 0.0
        %v1020 = vadd.f32 %v1004, 0.0
        %v1021 = vadd.f32 %v1005, 0.0
        %v1022 = vadd.f32 %v1006, 0.0
        %v1023 = vadd.f32 %v1007, 0.0
        %v1024 = vadd.f32 %v1008, 0.0
        %v1025 = vadd.f32 %v1009, 0.0
        %v1026 = vadd.f32 %v1010, 0.0
        %v1027 = vadd.f32 %v1011, 0.0
        %v1028 = vadd.f32 %v1012, 0.0
        %v1029 = vadd.f32 %v996, 0.0
        %v1030 = vsel %vm953, 1e+30, %v828
        %v1031 = vsel %vm954, 1e+30, %v829
        %v1032 = vsel %vm955, 1e+30, %v830
        %v1033 = vsel %vm956, 1e+30, %v831
        %v1034 = vsel %vm957, 1e+30, %v832
        %v1035 = vsel %vm958, 1e+30, %v833
        %v1036 = vsel %vm959, 1e+30, %v834
        %v1037 = vsel %vm960, 1e+30, %v835
        %v1038 = vsel %vm961, 1e+30, %v836
        %v1039 = vsel %vm962, 1e+30, %v837
        %v1040 = vsel %vm963, 1e+30, %v838
        %v1041 = vsel %vm964, 1e+30, %v839
        %v1042 = vsel %vm965, 1e+30, %v840
        %v1043 = vsel %vm966, 1e+30, %v841
        %v1044 = vsel %vm967, 1e+30, %v842
        %v1045 = vsel %vm968, 1e+30, %v843
        %v1046 = vmin.f32 %v1030, %v1034
        %v1047 = vmin.f32 %v1031, %v1035
        %v1048 = vmin.f32 %v1032, %v1036
        %v1049 = vmin.f32 %v1033, %v1037
        %v1050 = vmin.f32 %v1046, %v1038
        %v1051 = vmin.f32 %v1047, %v1039
        %v1052 = vmin.f32 %v1048, %v1040
        %v1053 = vmin.f32 %v1049, %v1041
        %v1054 = vmin.f32 %v1050, %v1042
        %v1055 = vmin.f32 %v1051, %v1043
        %v1056 = vmin.f32 %v1052, %v1044
        %v1057 = vmin.f32 %v1053, %v1045
        %v1058 = vmin.f32 %v1054, %v1055
        %v1059 = vmin.f32 %v1056, %v1057
        %v1060 = vmin.f32 %v1058, %v1059
        %v1061 = vrot.slane %v1060, 4
        %v1062 = vmin.f32 %v1060, %v1061
        %v1063 = vrot.slane %v1062, 2
        %v1064 = vmin.f32 %v1062, %v1063
        %v1065 = vrot.slane %v1064, 1
        %v1066 = vmin.f32 %v1064, %v1065
        %vm1067 = vcmp.le.f32.partialorder %v1030, %v1066
        %vm1068 = vcmp.le.f32.partialorder %v1031, %v1066
        %vm1069 = vcmp.le.f32.partialorder %v1032, %v1066
        %vm1070 = vcmp.le.f32.partialorder %v1033, %v1066
        %vm1071 = vcmp.le.f32.partialorder %v1034, %v1066
        %vm1072 = vcmp.le.f32.partialorder %v1035, %v1066
        %vm1073 = vcmp.le.f32.partialorder %v1036, %v1066
        %vm1074 = vcmp.le.f32.partialorder %v1037, %v1066
        %vm1075 = vcmp.le.f32.partialorder %v1038, %v1066
        %vm1076 = vcmp.le.f32.partialorder %v1039, %v1066
        %vm1077 = vcmp.le.f32.partialorder %v1040, %v1066
        %vm1078 = vcmp.le.f32.partialorder %v1041, %v1066
        %vm1079 = vcmp.le.f32.partialorder %v1042, %v1066
        %vm1080 = vcmp.le.f32.partialorder %v1043, %v1066
        %vm1081 = vcmp.le.f32.partialorder %v1044, %v1066
        %vm1082 = vcmp.le.f32.partialorder %v1045, %v1066
        %v1083 = vsel %vm1067, %v845, 128
        %v1084 = vsel %vm1068, %v846, 128
        %v1085 = vsel %vm1069, %v847, 128
        %v1086 = vsel %vm1070, %v848, 128
        %v1087 = vsel %vm1071, %v849, 128
        %v1088 = vsel %vm1072, %v850, 128
        %v1089 = vsel %vm1073, %v851, 128
        %v1090 = vsel %vm1074, %v852, 128
        %v1091 = vsel %vm1075, %v853, 128
        %v1092 = vsel %vm1076, %v854, 128
        %v1093 = vsel %vm1077, %v855, 128
        %v1094 = vsel %vm1078, %v856, 128
        %v1095 = vsel %vm1079, %v857, 128
        %v1096 = vsel %vm1080, %v858, 128
        %v1097 = vsel %vm1081, %v859, 128
        %v1098 = vsel %vm1082, %v860, 128
        %vm1099 = vcmp.lt.s32.totalorder %v1083, %v1087
        %v1100 = vsel %vm1099, %v1083, %v1087
        %vm1101 = vcmp.lt.s32.totalorder %v1084, %v1088
        %v1102 = vsel %vm1101, %v1084, %v1088
        %vm1103 = vcmp.lt.s32.totalorder %v1085, %v1089
        %v1104 = vsel %vm1103, %v1085, %v1089
        %vm1105 = vcmp.lt.s32.totalorder %v1086, %v1090
        %v1106 = vsel %vm1105, %v1086, %v1090
        %vm1107 = vcmp.lt.s32.totalorder %v1100, %v1091
        %v1108 = vsel %vm1107, %v1100, %v1091
        %vm1109 = vcmp.lt.s32.totalorder %v1102, %v1092
        %v1110 = vsel %vm1109, %v1102, %v1092
        %vm1111 = vcmp.lt.s32.totalorder %v1104, %v1093
        %v1112 = vsel %vm1111, %v1104, %v1093
        %vm1113 = vcmp.lt.s32.totalorder %v1106, %v1094
        %v1114 = vsel %vm1113, %v1106, %v1094
        %vm1115 = vcmp.lt.s32.totalorder %v1108, %v1095
        %v1116 = vsel %vm1115, %v1108, %v1095
        %vm1117 = vcmp.lt.s32.totalorder %v1110, %v1096
        %v1118 = vsel %vm1117, %v1110, %v1096
        %vm1119 = vcmp.lt.s32.totalorder %v1112, %v1097
        %v1120 = vsel %vm1119, %v1112, %v1097
        %vm1121 = vcmp.lt.s32.totalorder %v1114, %v1098
        %v1122 = vsel %vm1121, %v1114, %v1098
        %vm1123 = vcmp.lt.s32.totalorder %v1116, %v1118
        %v1124 = vsel %vm1123, %v1116, %v1118
        %vm1125 = vcmp.lt.s32.totalorder %v1120, %v1122
        %v1126 = vsel %vm1125, %v1120, %v1122
        %vm1127 = vcmp.lt.s32.totalorder %v1124, %v1126
        %v1128 = vsel %vm1127, %v1124, %v1126
        %v1129 = vrot.slane %v1128, 4
        %vm1130 = vcmp.lt.s32.totalorder %v1128, %v1129
        %v1131 = vsel %vm1130, %v1128, %v1129
        %v1132 = vrot.slane %v1131, 2
        %vm1133 = vcmp.lt.s32.totalorder %v1131, %v1132
        %v1134 = vsel %vm1133, %v1131, %v1132
        %v1135 = vrot.slane %v1134, 1
        %vm1136 = vcmp.lt.s32.totalorder %v1134, %v1135
        %v1137 = vsel %vm1136, %v1134, %v1135
        %vm1138 = vcmp.eq.s32.totalorder %v845, %v1137
        %vm1139 = vcmp.eq.s32.totalorder %v846, %v1137
        %vm1140 = vcmp.eq.s32.totalorder %v847, %v1137
        %vm1141 = vcmp.eq.s32.totalorder %v848, %v1137
        %vm1142 = vcmp.eq.s32.totalorder %v849, %v1137
        %vm1143 = vcmp.eq.s32.totalorder %v850, %v1137
        %vm1144 = vcmp.eq.s32.totalorder %v851, %v1137
        %vm1145 = vcmp.eq.s32.totalorder %v852, %v1137
        %vm1146 = vcmp.eq.s32.totalorder %v853, %v1137
        %vm1147 = vcmp.eq.s32.totalorder %v854, %v1137
        %vm1148 = vcmp.eq.s32.totalorder %v855, %v1137
        %vm1149 = vcmp.eq.s32.totalorder %v856, %v1137
        %vm1150 = vcmp.eq.s32.totalorder %v857, %v1137
        %vm1151 = vcmp.eq.s32.totalorder %v858, %v1137
        %vm1152 = vcmp.eq.s32.totalorder %v859, %v1137
        %vm1153 = vcmp.eq.s32.totalorder %v860, %v1137
        %v1154 = vrsqrt.pop %v1066
        %v1155 = vmul.f32 %v1154, %v1066
        %v1156 = vmul.f32 %v1155, %v1154
        %v1157 = vmul.f32 0.5, %v1156
        %v1158 = vsub.f32 1.5, %v1157
        %v1159 = vmul.f32 %v1154, %v1158
        %v1160 = vmul.f32 %v1066, %v1159
        %vm1161 = vcmp.eq.f32.partialorder %v1066, inf
        %v1162 = vsel %vm1161, %v1066, %v1160
        %vm1163 = vcmp.eq.f32.partialorder %v1066, 0.0
        %v1164 = vand.u32 %v1066, 2147483648
        %v1165 = vsel %vm1163, %v1164, %v1162
        %v1166 = vadd.f32 %v1165, 1e-06
        %v1167 = vrcp.pop %v1166
        %v1168 = vmul.f32 %v1166, %v1167
        %v1169 = vsub.f32 1.0, %v1168
        %v1170 = vmul.f32 %v1167, %v1169
        %v1171 = vadd.f32 %v1167, %v1170
        %vm1172 = vweird.f32 %v1166
        %vm1173 = vweird.f32 %v1167
        %vm1174 = vmor %vm1172, %vm1173
        %v1175 = vsel %vm1174, %v1167, %v1171
        %v1176 = vand.u32 2147483647, %v1166
        %vm1177 = vcmp.eq.f32.partialorder %v1176, 8.507059e+37
        %v1178 = vand.u32 %v1166, 2147483648
        %v1179 = vor.u32 1.1754944e-38, %v1178
        %v1180 = vsel %vm1177, %v1179, %v1175
        %v1181 = vmul.f32 1.0, %v1180
        %v1182 = vsel %vm1138, %v1181, 0.0
        %v1183 = vsel %vm1139, %v1181, 0.0
        %v1184 = vsel %vm1140, %v1181, 0.0
        %v1185 = vsel %vm1141, %v1181, 0.0
        %v1186 = vsel %vm1142, %v1181, 0.0
        %v1187 = vsel %vm1143, %v1181, 0.0
        %v1188 = vsel %vm1144, %v1181, 0.0
        %v1189 = vsel %vm1145, %v1181, 0.0
        %v1190 = vsel %vm1146, %v1181, 0.0
        %v1191 = vsel %vm1147, %v1181, 0.0
        %v1192 = vsel %vm1148, %v1181, 0.0
        %v1193 = vsel %vm1149, %v1181, 0.0
        %v1194 = vsel %vm1150, %v1181, 0.0
        %v1195 = vsel %vm1151, %v1181, 0.0
        %v1196 = vsel %vm1152, %v1181, 0.0
        %v1197 = vsel %vm1153, %v1181, 0.0
        %v1198 = vadd.f32 %v1013, %v1182
        %v1199 = vadd.f32 %v1014, %v1183
        %v1200 = vadd.f32 %v1015, %v1184
        %v1201 = vadd.f32 %v1016, %v1185
        %v1202 = vadd.f32 %v1017, %v1186
        %v1203 = vadd.f32 %v1018, %v1187
        %v1204 = vadd.f32 %v1019, %v1188
        %v1205 = vadd.f32 %v1020, %v1189
        %v1206 = vadd.f32 %v1021, %v1190
        %v1207 = vadd.f32 %v1022, %v1191
        %v1208 = vadd.f32 %v1023, %v1192
        %v1209 = vadd.f32 %v1024, %v1193
        %v1210 = vadd.f32 %v1025, %v1194
        %v1211 = vadd.f32 %v1026, %v1195
        %v1212 = vadd.f32 %v1027, %v1196
        %v1213 = vadd.f32 %v1028, %v1197
        %v1214 = vadd.f32 %v1029, %v1181
        %v1215 = vsel %vm1138, 1e+30, %v1030
        %v1216 = vsel %vm1139, 1e+30, %v1031
        %v1217 = vsel %vm1140, 1e+30, %v1032
        %v1218 = vsel %vm1141, 1e+30, %v1033
        %v1219 = vsel %vm1142, 1e+30, %v1034
        %v1220 = vsel %vm1143, 1e+30, %v1035
        %v1221 = vsel %vm1144, 1e+30, %v1036
        %v1222 = vsel %vm1145, 1e+30, %v1037
        %v1223 = vsel %vm1146, 1e+30, %v1038
        %v1224 = vsel %vm1147, 1e+30, %v1039
        %v1225 = vsel %vm1148, 1e+30, %v1040
        %v1226 = vsel %vm1149, 1e+30, %v1041
        %v1227 = vsel %vm1150, 1e+30, %v1042
        %v1228 = vsel %vm1151, 1e+30, %v1043
        %v1229 = vsel %vm1152, 1e+30, %v1044
        %v1230 = vsel %vm1153, 1e+30, %v1045
        %v1231 = vmin.f32 %v1215, %v1219
        %v1232 = vmin.f32 %v1216, %v1220
        %v1233 = vmin.f32 %v1217, %v1221
        %v1234 = vmin.f32 %v1218, %v1222
        %v1235 = vmin.f32 %v1231, %v1223
        %v1236 = vmin.f32 %v1232, %v1224
        %v1237 = vmin.f32 %v1233, %v1225
        %v1238 = vmin.f32 %v1234, %v1226
        %v1239 = vmin.f32 %v1235, %v1227
        %v1240 = vmin.f32 %v1236, %v1228
        %v1241 = vmin.f32 %v1237, %v1229
        %v1242 = vmin.f32 %v1238, %v1230
        %v1243 = vmin.f32 %v1239, %v1240
        %v1244 = vmin.f32 %v1241, %v1242
        %v1245 = vmin.f32 %v1243, %v1244
        %v1246 = vrot.slane %v1245, 4
        %v1247 = vmin.f32 %v1245, %v1246
        %v1248 = vrot.slane %v1247, 2
        %v1249 = vmin.f32 %v1247, %v1248
        %v1250 = vrot.slane %v1249, 1
        %v1251 = vmin.f32 %v1249, %v1250
        %vm1252 = vcmp.le.f32.partialorder %v1215, %v1251
        %vm1253 = vcmp.le.f32.partialorder %v1216, %v1251
        %vm1254 = vcmp.le.f32.partialorder %v1217, %v1251
        %vm1255 = vcmp.le.f32.partialorder %v1218, %v1251
        %vm1256 = vcmp.le.f32.partialorder %v1219, %v1251
        %vm1257 = vcmp.le.f32.partialorder %v1220, %v1251
        %vm1258 = vcmp.le.f32.partialorder %v1221, %v1251
        %vm1259 = vcmp.le.f32.partialorder %v1222, %v1251
        %vm1260 = vcmp.le.f32.partialorder %v1223, %v1251
        %vm1261 = vcmp.le.f32.partialorder %v1224, %v1251
        %vm1262 = vcmp.le.f32.partialorder %v1225, %v1251
        %vm1263 = vcmp.le.f32.partialorder %v1226, %v1251
        %vm1264 = vcmp.le.f32.partialorder %v1227, %v1251
        %vm1265 = vcmp.le.f32.partialorder %v1228, %v1251
        %vm1266 = vcmp.le.f32.partialorder %v1229, %v1251
        %vm1267 = vcmp.le.f32.partialorder %v1230, %v1251
        %v1268 = vsel %vm1252, %v845, 128
        %v1269 = vsel %vm1253, %v846, 128
        %v1270 = vsel %vm1254, %v847, 128
        %v1271 = vsel %vm1255, %v848, 128
        %v1272 = vsel %vm1256, %v849, 128
        %v1273 = vsel %vm1257, %v850, 128
        %v1274 = vsel %vm1258, %v851, 128
        %v1275 = vsel %vm1259, %v852, 128
        %v1276 = vsel %vm1260, %v853, 128
        %v1277 = vsel %vm1261, %v854, 128
        %v1278 = vsel %vm1262, %v855, 128
        %v1279 = vsel %vm1263, %v856, 128
        %v1280 = vsel %vm1264, %v857, 128
        %v1281 = vsel %vm1265, %v858, 128
        %v1282 = vsel %vm1266, %v859, 128
        %v1283 = vsel %vm1267, %v860, 128
        %vm1284 = vcmp.lt.s32.totalorder %v1268, %v1272
        %v1285 = vsel %vm1284, %v1268, %v1272
        %vm1286 = vcmp.lt.s32.totalorder %v1269, %v1273
        %v1287 = vsel %vm1286, %v1269, %v1273
        %vm1288 = vcmp.lt.s32.totalorder %v1270, %v1274
        %v1289 = vsel %vm1288, %v1270, %v1274
        %vm1290 = vcmp.lt.s32.totalorder %v1271, %v1275
        %v1291 = vsel %vm1290, %v1271, %v1275
        %vm1292 = vcmp.lt.s32.totalorder %v1285, %v1276
        %v1293 = vsel %vm1292, %v1285, %v1276
        %vm1294 = vcmp.lt.s32.totalorder %v1287, %v1277
        %v1295 = vsel %vm1294, %v1287, %v1277
        %vm1296 = vcmp.lt.s32.totalorder %v1289, %v1278
        %v1297 = vsel %vm1296, %v1289, %v1278
        %vm1298 = vcmp.lt.s32.totalorder %v1291, %v1279
        %v1299 = vsel %vm1298, %v1291, %v1279
        %vm1300 = vcmp.lt.s32.totalorder %v1293, %v1280
        %v1301 = vsel %vm1300, %v1293, %v1280
        %vm1302 = vcmp.lt.s32.totalorder %v1295, %v1281
        %v1303 = vsel %vm1302, %v1295, %v1281
        %vm1304 = vcmp.lt.s32.totalorder %v1297, %v1282
        %v1305 = vsel %vm1304, %v1297, %v1282
        %vm1306 = vcmp.lt.s32.totalorder %v1299, %v1283
        %v1307 = vsel %vm1306, %v1299, %v1283
        %vm1308 = vcmp.lt.s32.totalorder %v1301, %v1303
        %v1309 = vsel %vm1308, %v1301, %v1303
        %vm1310 = vcmp.lt.s32.totalorder %v1305, %v1307
        %v1311 = vsel %vm1310, %v1305, %v1307
        %vm1312 = vcmp.lt.s32.totalorder %v1309, %v1311
        %v1313 = vsel %vm1312, %v1309, %v1311
        %v1314 = vrot.slane %v1313, 4
        %vm1315 = vcmp.lt.s32.totalorder %v1313, %v1314
        %v1316 = vsel %vm1315, %v1313, %v1314
        %v1317 = vrot.slane %v1316, 2
        %vm1318 = vcmp.lt.s32.totalorder %v1316, %v1317
        %v1319 = vsel %vm1318, %v1316, %v1317
        %v1320 = vrot.slane %v1319, 1
        %vm1321 = vcmp.lt.s32.totalorder %v1319, %v1320
        %v1322 = vsel %vm1321, %v1319, %v1320
        %vm1323 = vcmp.eq.s32.totalorder %v845, %v1322
        %vm1324 = vcmp.eq.s32.totalorder %v846, %v1322
        %vm1325 = vcmp.eq.s32.totalorder %v847, %v1322
        %vm1326 = vcmp.eq.s32.totalorder %v848, %v1322
        %vm1327 = vcmp.eq.s32.totalorder %v849, %v1322
        %vm1328 = vcmp.eq.s32.totalorder %v850, %v1322
        %vm1329 = vcmp.eq.s32.totalorder %v851, %v1322
        %vm1330 = vcmp.eq.s32.totalorder %v852, %v1322
        %vm1331 = vcmp.eq.s32.totalorder %v853, %v1322
        %vm1332 = vcmp.eq.s32.totalorder %v854, %v1322
        %vm1333 = vcmp.eq.s32.totalorder %v855, %v1322
        %vm1334 = vcmp.eq.s32.totalorder %v856, %v1322
        %vm1335 = vcmp.eq.s32.totalorder %v857, %v1322
        %vm1336 = vcmp.eq.s32.totalorder %v858, %v1322
        %vm1337 = vcmp.eq.s32.totalorder %v859, %v1322
        %vm1338 = vcmp.eq.s32.totalorder %v860, %v1322
        %v1339 = vrsqrt.pop %v1251
        %v1340 = vmul.f32 %v1339, %v1251
        %v1341 = vmul.f32 %v1340, %v1339
        %v1342 = vmul.f32 0.5, %v1341
        %v1343 = vsub.f32 1.5, %v1342
        %v1344 = vmul.f32 %v1339, %v1343
        %v1345 = vmul.f32 %v1251, %v1344
        %vm1346 = vcmp.eq.f32.partialorder %v1251, inf
        %v1347 = vsel %vm1346, %v1251, %v1345
        %vm1348 = vcmp.eq.f32.partialorder %v1251, 0.0
        %v1349 = vand.u32 %v1251, 2147483648
        %v1350 = vsel %vm1348, %v1349, %v1347
        %v1351 = vadd.f32 %v1350, 1e-06
        %v1352 = vrcp.pop %v1351
        %v1353 = vmul.f32 %v1351, %v1352
        %v1354 = vsub.f32 1.0, %v1353
        %v1355 = vmul.f32 %v1352, %v1354
        %v1356 = vadd.f32 %v1352, %v1355
        %vm1357 = vweird.f32 %v1351
        %vm1358 = vweird.f32 %v1352
        %vm1359 = vmor %vm1357, %vm1358
        %v1360 = vsel %vm1359, %v1352, %v1356
        %v1361 = vand.u32 2147483647, %v1351
        %vm1362 = vcmp.eq.f32.partialorder %v1361, 8.507059e+37
        %v1363 = vand.u32 %v1351, 2147483648
        %v1364 = vor.u32 1.1754944e-38, %v1363
        %v1365 = vsel %vm1362, %v1364, %v1360
        %v1366 = vmul.f32 1.0, %v1365
        %v1367 = vsel %vm1323, %v1366, 0.0
        %v1368 = vsel %vm1324, %v1366, 0.0
        %v1369 = vsel %vm1325, %v1366, 0.0
        %v1370 = vsel %vm1326, %v1366, 0.0
        %v1371 = vsel %vm1327, %v1366, 0.0
        %v1372 = vsel %vm1328, %v1366, 0.0
        %v1373 = vsel %vm1329, %v1366, 0.0
        %v1374 = vsel %vm1330, %v1366, 0.0
        %v1375 = vsel %vm1331, %v1366, 0.0
        %v1376 = vsel %vm1332, %v1366, 0.0
        %v1377 = vsel %vm1333, %v1366, 0.0
        %v1378 = vsel %vm1334, %v1366, 0.0
        %v1379 = vsel %vm1335, %v1366, 0.0
        %v1380 = vsel %vm1336, %v1366, 0.0
        %v1381 = vsel %vm1337, %v1366, 0.0
        %v1382 = vsel %vm1338, %v1366, 0.0
        %v1383 = vadd.f32 %v1198, %v1367
        %v1384 = vadd.f32 %v1199, %v1368
        %v1385 = vadd.f32 %v1200, %v1369
        %v1386 = vadd.f32 %v1201, %v1370
        %v1387 = vadd.f32 %v1202, %v1371
        %v1388 = vadd.f32 %v1203, %v1372
        %v1389 = vadd.f32 %v1204, %v1373
        %v1390 = vadd.f32 %v1205, %v1374
        %v1391 = vadd.f32 %v1206, %v1375
        %v1392 = vadd.f32 %v1207, %v1376
        %v1393 = vadd.f32 %v1208, %v1377
        %v1394 = vadd.f32 %v1209, %v1378
        %v1395 = vadd.f32 %v1210, %v1379
        %v1396 = vadd.f32 %v1211, %v1380
        %v1397 = vadd.f32 %v1212, %v1381
        %v1398 = vadd.f32 %v1213, %v1382
        %v1399 = vadd.f32 %v1214, %v1366
        %v1400 = vld [vmem:[%s464] sm:$0xff]
        %1401 = vmatpush.msra.mxu0 %v1398
        %1402 = vmatpush.msra.mxu0 %v1397
        %1403 = vmatpush.msra.mxu0 %v1396
        %1404 = vmatpush.msra.mxu0 %v1395
        %1405 = vmatpush.msra.mxu0 %v1394
        %1406 = vmatpush.msra.mxu0 %v1393
        %1407 = vmatpush.msra.mxu0 %v1392
        %1408 = vmatpush.msra.mxu0 %v1391
        %1409 = vmatpush.msra.mxu0 %v1390
        %1410 = vmatpush.msra.mxu0 %v1389
        %1411 = vmatpush.msra.mxu0 %v1388
        %1412 = vmatpush.msra.mxu0 %v1387
        %1413 = vmatpush.msra.mxu0 %v1386
        %1414 = vmatpush.msra.mxu0 %v1385
        %1415 = vmatpush.msra.mxu0 %v1384
        %1416 = vmatpush.msra.mxu0 %v1383
        %1417 = vmatmul.f32.gmra.mxu0 %v1400
        %v1418 = vpop.f32.mrf.mxu0
        %v1419 = vadd.f32 0.0, %v1418
        %1420 = vdwg.mxu0
        %v1421 = vrcp.pop %v1399
        %v1422 = vmul.f32 %v1399, %v1421
        %v1423 = vsub.f32 1.0, %v1422
        %v1424 = vmul.f32 %v1421, %v1423
        %v1425 = vadd.f32 %v1421, %v1424
        %vm1426 = vweird.f32 %v1399
        %vm1427 = vweird.f32 %v1421
        %vm1428 = vmor %vm1426, %vm1427
        %v1429 = vsel %vm1428, %v1421, %v1425
        %v1430 = vand.u32 2147483647, %v1399
        %vm1431 = vcmp.eq.f32.partialorder %v1430, 8.507059e+37
        %v1432 = vand.u32 %v1399, 2147483648
        %v1433 = vor.u32 1.1754944e-38, %v1432
        %v1434 = vsel %vm1431, %v1433, %v1429
        %v1435 = vmul.f32 1.0, %v1434
        %v1436 = vmul.f32 %v1419, %v1435
        %v1437 = vld [vmem:[%s4] sm:$0xff]
        %v1438 = vld [vmem:[%s4 + $0x8] sm:$0xff]
        %v1439 = vld [vmem:[%s4 + $0x10] sm:$0xff]
        %v1440 = vld [vmem:[%s4 + $0x18] sm:$0xff]
        %v1441 = vld [vmem:[%s5] sm:$0xff]
        %v1442 = vld [vmem:[%s5 + $0x8] sm:$0xff]
        %v1443 = vld [vmem:[%s5 + $0x10] sm:$0xff]
        %v1444 = vld [vmem:[%s5 + $0x18] sm:$0xff]
        %v1445 = vld [vmem:[%s471] sm:$0xf]
        %vm1446 = vcmask 31744
        %v1448 = vsel %vm1446, %v1441, 0
        %v1451 = vsel %vm1446, %v1442, 0
        %v1454 = vsel %vm1446, %v1443, 0
        %v1457 = vsel %vm1446, %v1444, 0
        %vm1459 = vcmask 1043456
        %v1461 = vsel %vm1459, %v1445, 0
        %1463 = vmatpush.msra.mxu0 0.0
        %1464 = vmatpush.msra.mxu0 0.0
        %1465 = vmatpush.msra.mxu0 0.0
        %1466 = vmatpush.msra.mxu0 0.0
        %1467 = vmatpush.msra.mxu0 0.0
        %1468 = vmatpush.msra.mxu0 0.0
        %1469 = vmatpush.msra.mxu0 0.0
        %1470 = vmatpush.msra.mxu0 0.0
        %1471 = vmatpush.msra.mxu0 0.0
        %1472 = vmatpush.msra.mxu0 0.0
        %1473 = vmatpush.msra.mxu0 0.0
        %1474 = vmatpush.msra.mxu0 0.0
        %1475 = vmatpush.msra.mxu0 0.0
        %1476 = vmatpush.msra.mxu0 0.0
        %1477 = vmatpush.msra.mxu0 0.0
        %1478 = vmatpush.msra.mxu0 %v1461
        %1479 = vmatmul.f32.gmra.mxu0 %v1448
        %v1480 = vpop.f32.mrf.mxu0
        %v1481 = vadd.f32 0.0, %v1480
        %1482 = vmatmul.f32.gmra.mxu0 %v1451
        %v1483 = vpop.f32.mrf.mxu0
        %v1484 = vadd.f32 0.0, %v1483
        %1485 = vmatmul.f32.gmra.mxu0 %v1454
        %v1486 = vpop.f32.mrf.mxu0
        %v1487 = vadd.f32 0.0, %v1486
        %1488 = vmatmul.f32.gmra.mxu0 %v1457
        %v1489 = vpop.f32.mrf.mxu0
        %v1490 = vadd.f32 0.0, %v1489
        %1491 = vdwg.mxu0
        %vm1492 = vcmask 64512
        %v1494 = vsel %vm1492, %v1437, 0
        %v1497 = vsel %vm1492, %v1438, 0
        %v1500 = vsel %vm1492, %v1439, 0
        %v1503 = vsel %vm1492, %v1440, 0
        %1505 = vmatpush.msra.mxu0 0.0
        %1506 = vmatpush.msra.mxu0 0.0
        %1507 = vmatpush.msra.mxu0 0.0
        %1508 = vmatpush.msra.mxu0 0.0
        %1509 = vmatpush.msra.mxu0 0.0
        %1510 = vmatpush.msra.mxu0 0.0
        %1511 = vmatpush.msra.mxu0 0.0
        %1512 = vmatpush.msra.mxu0 0.0
        %1513 = vmatpush.msra.mxu0 0.0
        %1514 = vmatpush.msra.mxu0 0.0
        %1515 = vmatpush.msra.mxu0 0.0
        %1516 = vmatpush.msra.mxu0 0.0
        %1517 = vmatpush.msra.mxu0 0.0
        %1518 = vmatpush.msra.mxu0 0.0
        %1519 = vmatpush.msra.mxu0 0.0
        %1520 = vmatpush.msra.mxu0 %v1436
        %1521 = vmatmul.f32.gmra.mxu0 %v1494
        %v1522 = vpop.f32.mrf.mxu0
        %v1523 = vadd.f32 %v1481, %v1522
        %1524 = vmatmul.f32.gmra.mxu0 %v1497
        %v1525 = vpop.f32.mrf.mxu0
        %v1526 = vadd.f32 %v1484, %v1525
        %1527 = vmatmul.f32.gmra.mxu0 %v1500
        %v1528 = vpop.f32.mrf.mxu0
        %v1529 = vadd.f32 %v1487, %v1528
        %1530 = vmatmul.f32.gmra.mxu0 %v1503
        %v1531 = vpop.f32.mrf.mxu0
        %v1532 = vadd.f32 %v1490, %v1531
        %1533 = vdwg.mxu0
        %v1534 = vld [vmem:[%s6] sm:$0xff]
        %v1535 = vld [vmem:[%s6 + $0x8] sm:$0xff]
        %v1536 = vld [vmem:[%s6 + $0x10] sm:$0xff]
        %v1537 = vld [vmem:[%s6 + $0x18] sm:$0xff]
        %1539 = vset.pattern.permute.xlu0 0
        %1540 = vperm.xlu0 %1539, %v1534
        %v1541 = vpop.permute.xlu0 %1540
        %1544 = vset.pattern.permute.xlu0 0
        %1545 = vperm.xlu0 %1544, %v1535
        %v1546 = vpop.permute.xlu0 %1545
        %1549 = vset.pattern.permute.xlu0 0
        %1550 = vperm.xlu0 %1549, %v1536
        %v1551 = vpop.permute.xlu0 %1550
        %1554 = vset.pattern.permute.xlu0 0
        %1555 = vperm.xlu0 %1554, %v1537
        %v1556 = vpop.permute.xlu0 %1555
        %v1558 = vmul.f32 %v1523, %v1541
        %v1559 = vmul.f32 %v1526, %v1546
        %v1560 = vmul.f32 %v1529, %v1551
        %v1561 = vmul.f32 %v1532, %v1556
        %v1562 = vld [vmem:[%s7] sm:$0xff]
        %v1563 = vld [vmem:[%s7 + $0x8] sm:$0xff]
        %v1564 = vld [vmem:[%s7 + $0x10] sm:$0xff]
        %v1565 = vld [vmem:[%s7 + $0x18] sm:$0xff]
        %1567 = vset.pattern.permute.xlu0 0
        %1568 = vperm.xlu0 %1567, %v1562
        %v1569 = vpop.permute.xlu0 %1568
        %1572 = vset.pattern.permute.xlu0 0
        %1573 = vperm.xlu0 %1572, %v1563
        %v1574 = vpop.permute.xlu0 %1573
        %1577 = vset.pattern.permute.xlu0 0
        %1578 = vperm.xlu0 %1577, %v1564
        %v1579 = vpop.permute.xlu0 %1578
        %1582 = vset.pattern.permute.xlu0 0
        %1583 = vperm.xlu0 %1582, %v1565
        %v1584 = vpop.permute.xlu0 %1583
        %v1586 = vadd.f32 %v1558, %v1569
        %v1587 = vadd.f32 %v1559, %v1574
        %v1588 = vadd.f32 %v1560, %v1579
        %v1589 = vadd.f32 %v1561, %v1584
        %v1590 = vmax.f32 %v1586, 0.0
        %v1591 = vmax.f32 %v1587, 0.0
        %v1592 = vmax.f32 %v1588, 0.0
        %v1593 = vmax.f32 %v1589, 0.0
        %v1594 = vld [vmem:[%s8] sm:$0xff]
        %v1595 = vld [vmem:[%s8 + $0x8] sm:$0xff]
        %vm1596 = vcmask 261120
        %v1598 = vsel %vm1596, %v1594, 0
        %v1601 = vsel %vm1596, %v1595, 0
        %1603 = vmatpush.msra.mxu0 0.0
        %1604 = vmatpush.msra.mxu0 0.0
        %1605 = vmatpush.msra.mxu0 0.0
        %1606 = vmatpush.msra.mxu0 0.0
        %1607 = vmatpush.msra.mxu0 0.0
        %1608 = vmatpush.msra.mxu0 0.0
        %1609 = vmatpush.msra.mxu0 0.0
        %1610 = vmatpush.msra.mxu0 0.0
        %1611 = vmatpush.msra.mxu0 0.0
        %1612 = vmatpush.msra.mxu0 0.0
        %1613 = vmatpush.msra.mxu0 0.0
        %1614 = vmatpush.msra.mxu0 0.0
        %1615 = vmatpush.msra.mxu0 %v1593
        %1616 = vmatpush.msra.mxu0 %v1592
        %1617 = vmatpush.msra.mxu0 %v1591
        %1618 = vmatpush.msra.mxu0 %v1590
        %1619 = vmatmul.f32.gmra.mxu0 %v1598
        %v1620 = vpop.f32.mrf.mxu0
        %v1621 = vadd.f32 0.0, %v1620
        %1622 = vmatmul.f32.gmra.mxu0 %v1601
        %v1623 = vpop.f32.mrf.mxu0
        %v1624 = vadd.f32 0.0, %v1623
        %1625 = vdwg.mxu0
        %v1626 = vld [vmem:[%s9] sm:$0xff]
        %v1627 = vld [vmem:[%s9 + $0x8] sm:$0xff]
        %1629 = vset.pattern.permute.xlu0 0
        %1630 = vperm.xlu0 %1629, %v1626
        %v1631 = vpop.permute.xlu0 %1630
        %1634 = vset.pattern.permute.xlu0 0
        %1635 = vperm.xlu0 %1634, %v1627
        %v1636 = vpop.permute.xlu0 %1635
        %v1638 = vmul.f32 %v1621, %v1631
        %v1639 = vmul.f32 %v1624, %v1636
        %v1640 = vld [vmem:[%s10] sm:$0xff]
        %v1641 = vld [vmem:[%s10 + $0x8] sm:$0xff]
        %1643 = vset.pattern.permute.xlu0 0
        %1644 = vperm.xlu0 %1643, %v1640
        %v1645 = vpop.permute.xlu0 %1644
        %1648 = vset.pattern.permute.xlu0 0
        %1649 = vperm.xlu0 %1648, %v1641
        %v1650 = vpop.permute.xlu0 %1649
        %v1652 = vadd.f32 %v1638, %v1645
        %v1653 = vadd.f32 %v1639, %v1650
        %v1654 = vmax.f32 %v1652, 0.0
        %v1655 = vmax.f32 %v1653, 0.0
        %1656 = vst [vmem:[%s448] sm:$0xff] %v1654
        %1657 = vst [vmem:[%s448 + $0x8] sm:$0xff] %v1655
        %s1658 = sand.u32 %s302, 1
        %s1659 = scalar_lea.sflag [#allocation3], %s1658
        %s1660 = sand.u32 %s302, 1
        %s1661 = smul.addr %s1660, 16
        %s1662 = scalar_lea.vmem [#allocation2], %s1661
        // Predicated region
        $region65: #{tpu_custom_call.1} parent=63 // pred_check
          %p1663 = pneg %p312
        $region66: #{tpu_custom_call.1} parent=63 // pred_check_branch
          %1665 = sbr.rel (%p1663) target = $region68
        $region67: #{tpu_custom_call.1} parent=63 // pred_region
          %1667 = vsyncadd %s1659, 0
          %s1668 = smul.addr %s29, 2
          %s1669 = sadd.s32 %s30, %s1668
          %s1670 = smul.addr %s1669, 8
          %s1671 = scalar_lea.hbm %s11, %s1670
          %s1672 = sshll.u32 %s1662, 4
          %s1673 = int_to_ptr.vmem [resolvable:$true] %s1672
          %s1674 = sshll.u32 %s1671, 4
          %s1675 = int_to_ptr.hbm [resolvable:$true] %s1674
          %1680 = dma.vmem_to_hbm [thread:$0]  %s1673, 256, %s1675, %s1659, 128, 128, 8
        $region68: #{tpu_custom_call.1} parent=63 // pred_fallthru
          _
      $region64: #{tpu_custom_call.1} parent=5 // pred_fallthru
        _
      %p1681 = scmp.le.s32.totalorder 2, %s20
      // Predicated region
      $region69: #{tpu_custom_call.1} parent=5 // pred_check
        %p1682 = pneg %p1681
      $region70: #{tpu_custom_call.1} parent=5 // pred_check_branch
        %1684 = sbr.rel (%p1682) target = $region72
      $region71: #{tpu_custom_call.1} parent=5 // pred_region
        %s1685 = ssub.s32 %s20, 2
        // Predicated region
        $region73: #{tpu_custom_call.1} parent=71 // pred_check
          %p1686 = pneg %p318
        $region74: #{tpu_custom_call.1} parent=71 // pred_check_branch
          %1688 = sbr.rel (%p1686) target = $region76
        $region75: #{tpu_custom_call.1} parent=71 // pred_region
          %s1689 = sand.u32 %s303, 1
          %s1690 = scalar_lea.sflag [#allocation3], %s1689
          %s1691 = sand.u32 %s303, 1
          %s1692 = smul.addr %s1691, 16
          %s1693 = scalar_lea.vmem [#allocation2], %s1692
          %1695 = dma.done %s1690, 256
        $region76: #{tpu_custom_call.1} parent=71 // pred_fallthru
          _
      $region72: #{tpu_custom_call.1} parent=5 // pred_fallthru
        _
    $region6: #{tpu_custom_call.1} parent=1 // loop_footer
      %s24 = sadd.s32 1, %s20
    $region7: #{tpu_custom_call.1} parent=1 // loop_footer_branch
      %19 = sbr.rel target = $region3
    $region8: #{tpu_custom_call.1} parent=1 // loop_exit
      _
    %1696 = vsyncpa [#allocation3], 1
    %s1697 = scalar_lea.sflag [#allocation3], 1
    %1698 = vsyncpa %s1697, 1

</llo_original>
